<compile_context>
chip_gen: v7x
topology: tpu7x:2x2x1
jax: 0.10.0
libtpu: 0.0.40
codegen_flags: <defaults>
</compile_context>

<pallas_src>
import jax
import jax.numpy as jnp
import numpy as np
from jax.experimental import pallas as pl
from jax.experimental.pallas import tpu as pltpu

# ---------------- model hyper-parameters (small, deterministic demo) -----------
VOCAB_SIZE = 50
EMBEDDING_DIM = 32          # module default is 100; kernel cost is independent of E
SEQ_LEN = 16
BATCH = 10
N_FILTERS = 8
FILTER_SIZES = (3, 4, 5)
OUTPUT_DIM = 1
DROPOUT = 0.5               # TODO(synk): dropout is identity (eval-mode forward only)

LANE = 128
SUBLANE = 8


def _round_up(x, m):
    return (x + m - 1) // m * m


# ------------------------------- Pallas kernel ---------------------------------
def _make_kernel(b_tile, seq_len, max_fs, v_pad, n_pad):
    rows = b_tile * seq_len

    def kernel(tok_ref, proj_ref, bias_ref, mask_ref, fcw_ref, fcb_ref, out_ref):
        # tok[b*L + t, i] = tokens[b, min(t+i, L-1)]  (window-shifted in wrapper).
        tok = tok_ref[...]                                       # (rows, max_fs) i32
        vocab_iota = jax.lax.broadcasted_iota(jnp.int32, (rows, v_pad), 1)

        # conv[b*L+t, idx*F+f] = sum_i proj[i, tok[b, t+i], idx*F+f]
        # One one-hot x proj_i MXU matmul per kernel row; rows with i >= fs_idx
        # have zero weights, so the sum is exactly the valid-window conv.
        conv = None
        for i in range(max_fs):
            onehot = jnp.where(tok[:, i:i + 1] == vocab_iota, 1.0, 0.0
                               ).astype(jnp.bfloat16)            # (rows, v_pad)
            part = jnp.dot(onehot, proj_ref[i],
                           preferred_element_type=jnp.float32)   # (rows, n_pad) f32
            conv = part if conv is None else conv + part

        # Lane-dense tail: bias + ReLU + invalid-window mask in one full-width
        # pass (mask->0 is safe: ReLU output >= 0), then one max-over-time.
        conv3 = conv.reshape(b_tile, seq_len, n_pad)             # free layout split
        act = jnp.maximum((conv3 + bias_ref[...]) * mask_ref[...], 0.0)
        pooled = jnp.max(act, axis=1)                            # (b_tile, n_pad) f32

        # FC (output_dim == 1): one small MXU matmul giving a lane-dense
        # (8, b_tile) block; row 0 is the real output row (rows 1-7 are zero
        # weight -> sigmoid(fc_b), ignored by the wrapper).
        logits = jnp.dot(fcw_ref[...], pooled.T,
                         preferred_element_type=jnp.float32)     # (8, b_tile)
        out_ref[...] = jax.nn.sigmoid(logits + fcb_ref[...]
                                      ).reshape(1, SUBLANE, b_tile)

    return kernel


def sentiment_cnn_forward(tokens, params, *, filter_sizes=FILTER_SIZES,
                          n_filters=N_FILTERS, output_dim=OUTPUT_DIM,
                          batch_tile=128):
    assert output_dim == 1, "fused FC path assumes output_dim == 1 (sigmoid head)"
    B, L = tokens.shape
    V = params["embedding"].shape[0]
    F = n_filters
    max_fs = max(filter_sizes)
    f_total = len(filter_sizes) * F                     # concat width (PyTorch cat)
    v_pad = _round_up(V, LANE)                          # one-hot / proj K dim
    n_pad = _round_up(f_total, LANE)                    # lane-dense conv output width

    b_t = _round_up(min(batch_tile, B), SUBLANE)        # batch rows per grid step
    b_pad = _round_up(B, b_t)
    num_tiles = b_pad // b_t
    rows_t = b_t * L

    # ---- one-time wrapper glue (plain JAX) ------------------------------------
    # (a) Fold embedding table + conv weights into per-kernel-row projections.
    emb = params["embedding"].astype(jnp.float32)                # (V, E) f32
    per_row = []
    for i in range(max_fs):
        cols = []
        for fs in filter_sizes:
            if i < fs:
                cols.append(emb @ params[f"conv{fs}_w"][i])      # (V, F) f32
            else:
                cols.append(jnp.zeros((V, F), jnp.float32))      # padding kernel row
        per_row.append(jnp.concatenate(cols, axis=1))            # (V, f_total)
    proj = jnp.stack(per_row, axis=0)                            # (max_fs, V, f_total)
    proj = jnp.pad(proj, ((0, 0), (0, v_pad - V), (0, n_pad - f_total))
                   ).astype(jnp.bfloat16)                        # single bf16 rounding

    # (b) Window-shifted token ids (tiny int32 stream; the only per-row HBM input).
    tok = jnp.pad(tokens.astype(jnp.int32), ((0, b_pad - B), (0, 0)))
    widx = jnp.minimum(jnp.arange(L)[:, None] + jnp.arange(max_fs)[None, :], L - 1)
    tok_sh = tok[:, widx].reshape(b_pad * L, max_fs)             # (b_pad*L, max_fs)

    # (c) Full-width bias, valid-window mask (per column / filter size), FC rows.
    bias = jnp.concatenate([params[f"conv{fs}_b"] for fs in filter_sizes], axis=1)
    bias = jnp.pad(bias, ((0, 0), (0, n_pad - f_total))).astype(jnp.float32)
    t_idx = jnp.arange(L)[:, None]
    mask = jnp.concatenate(
        [jnp.broadcast_to((t_idx <= L - fs).astype(jnp.float32), (L, F))
         for fs in filter_sizes], axis=1)
    mask = jnp.pad(mask, ((0, 0), (0, n_pad - f_total)))         # (L, n_pad) f32
    fcw = jnp.pad(params["fc_w"][:, 0], (0, n_pad - f_total)).reshape(1, n_pad)
    fcw = jnp.pad(fcw, ((0, SUBLANE - 1), (0, 0))).astype(jnp.float32)  # (8, n_pad)
    fcb = params["fc_b"].reshape(1, 1).astype(jnp.float32)

    kernel = _make_kernel(b_t, L, max_fs, v_pad, n_pad)

    out = pl.pallas_call(
        kernel,
        out_shape=jax.ShapeDtypeStruct((num_tiles, SUBLANE, b_t), jnp.float32),
        grid_spec=pltpu.PrefetchScalarGridSpec(
            num_scalar_prefetch=0,
            grid=(num_tiles,),
            in_specs=[
                pl.BlockSpec((rows_t, max_fs), lambda b: (b, 0)),           # token ids
                pl.BlockSpec((max_fs, v_pad, n_pad), lambda b: (0, 0, 0)),  # proj (VMEM resident)
                pl.BlockSpec((1, n_pad), lambda b: (0, 0)),                 # conv bias
                pl.BlockSpec((L, n_pad), lambda b: (0, 0)),                 # window mask
                pl.BlockSpec((SUBLANE, n_pad), lambda b: (0, 0)),           # fc weight
                pl.BlockSpec((1, 1), lambda b: (0, 0)),                     # fc bias
            ],
            out_specs=pl.BlockSpec((1, SUBLANE, b_t), lambda b: (b, 0, 0)),
        ),
        compiler_params=pltpu.CompilerParams(
            dimension_semantics=("parallel",),        # batch tiles -> v7x's 2 TCs
            vmem_limit_bytes=32 * 1024 * 1024),       # headroom for large batch tiles
    )(tok_sh, proj, bias, mask, fcw, fcb)

    return out[:, 0, :].reshape(b_pad, 1)[:B]


# ------------------------------ pure-JAX reference ------------------------------
def ref_forward(tokens, params, *, filter_sizes=FILTER_SIZES, n_filters=N_FILTERS):
    emb = params["embedding"][tokens]                      # (B, L, E) f32
    B, L, E = emb.shape
    pooled = []
    for fs in filter_sizes:
        w = params[f"conv{fs}_w"]                          # (fs, E, n_filters)
        b = params[f"conv{fs}_b"]                          # (1, n_filters)
        nw = L - fs + 1
        conv = jnp.zeros((B, nw, n_filters), jnp.float32)
        for i in range(fs):
            conv = conv + jnp.einsum("ble,ef->blf", emb[:, i:i + nw, :], w[i])
        conv = jnp.maximum(conv + b[None], 0.0)
        pooled.append(jnp.max(conv, axis=1))               # (B, n_filters)
    cat = jnp.concatenate(pooled, axis=1)
    return jax.nn.sigmoid(cat @ params["fc_w"] + params["fc_b"])


# ------------------------------------ main --------------------------------------
def init_params(key):
    keys = jax.random.split(key, 3 + 2 * len(FILTER_SIZES))
    params = {}
    # Embedding table: synthetic stand-in for load_pretrained_embeddings.
    params["embedding"] = 0.6 * jax.random.normal(
        keys[0], (VOCAB_SIZE + 1, EMBEDDING_DIM), jnp.float32)
    for i, fs in enumerate(FILTER_SIZES):
        # PyTorch Conv2d weight (n_filters, 1, fs, E) stored as (fs, E, n_filters).
        params[f"conv{fs}_w"] = 0.1 * jax.random.normal(
            keys[1 + 2 * i], (fs, EMBEDDING_DIM, N_FILTERS), jnp.float32)
        params[f"conv{fs}_b"] = 0.1 * jax.random.normal(
            keys[2 + 2 * i], (1, N_FILTERS), jnp.float32)
    f_total = len(FILTER_SIZES) * N_FILTERS
    # nn.Linear(F_total, output_dim): weight stored pre-transposed (F_total, out).
    params["fc_w"] = 0.1 * jax.random.normal(
        keys[-2], (f_total, OUTPUT_DIM), jnp.float32)
    params["fc_b"] = 0.1 * jax.random.normal(
        keys[-1], (1, OUTPUT_DIM), jnp.float32)
    return params


if __name__ == "__main__":
    key = jax.random.PRNGKey(0)
    pkey, tkey = jax.random.split(key)
    params = init_params(pkey)
    tokens = jax.random.randint(tkey, (BATCH, SEQ_LEN), 0, VOCAB_SIZE, jnp.int32)

    # Small demo: batch_tile=8 -> 2 grid steps (exercises batch tiling + padded
    # rows).  Production: batch_tile=128..512 and keep b_pad/b_t >= 2 (v7x TCs).
    out = sentiment_cnn_forward(tokens, params, batch_tile=8)
    out = jax.block_until_ready(out)

    ref = jax.block_until_ready(ref_forward(tokens, params))
    # Only the projection table is rounded to bf16; downstream math is f32.
    np.testing.assert_allclose(np.asarray(out), np.asarray(ref),
                               rtol=2e-2, atol=2e-2)
    print("KERNEL_OK")
</pallas_src>

<mosaic_0001>
module attributes {stable_mosaic.version = 11 : i64} {
  func.func @kernel(%arg0: i32, %arg1: memref<128x5xi32, #tpu.memory_space<vmem>>, %arg2: memref<5x128x128xbf16, #tpu.memory_space<vmem>>, %arg3: memref<1x128xf32, #tpu.memory_space<vmem>>, %arg4: memref<16x128xf32, #tpu.memory_space<vmem>>, %arg5: memref<8x128xf32, #tpu.memory_space<vmem>>, %arg6: memref<1x1xf32, #tpu.memory_space<vmem>>, %arg7: memref<1x8x8xf32, #tpu.memory_space<vmem>>) attributes {dimension_semantics = [#tpu.dimension_semantics<parallel>], iteration_bounds = array<i64: 2>, scalar_prefetch = 0 : i64, scratch_operands = 0 : i64, tpu.core_type = #tpu.core_type<tc>, window_params = [{transform_indices = @transform_0, window_bounds = array<i64: 128, 5>}, {pipeline_mode = #tpu.pipeline_mode<synchronous>, transform_indices = @transform_1, window_bounds = array<i64: 5, 128, 128>}, {pipeline_mode = #tpu.pipeline_mode<synchronous>, transform_indices = @transform_2, window_bounds = array<i64: 1, 128>}, {pipeline_mode = #tpu.pipeline_mode<synchronous>, transform_indices = @transform_3, window_bounds = array<i64: 16, 128>}, {pipeline_mode = #tpu.pipeline_mode<synchronous>, transform_indices = @transform_4, window_bounds = array<i64: 8, 128>}, {pipeline_mode = #tpu.pipeline_mode<synchronous>, transform_indices = @transform_5, window_bounds = array<i64: 1, 1>}, {transform_indices = @transform_6, window_bounds = array<i64: 1, 8, 8>}]} {
    %c0 = arith.constant 0 : index
    %c0_0 = arith.constant 0 : index
    %0 = vector.load %arg1[%c0, %c0_0] : memref<128x5xi32, #tpu.memory_space<vmem>>, vector<128x5xi32>
    %1 = tpu.iota {dimensions = array<i32: 1>} : vector<128x128xi32>
    %2 = vector.extract_strided_slice %0 {offsets = [0, 0], sizes = [128, 1], strides = [1, 1]} : vector<128x5xi32> to vector<128x1xi32>
    %3 = vector.broadcast %2 : vector<128x1xi32> to vector<128x128xi32>
    %4 = arith.cmpi eq, %3, %1 : vector<128x128xi32>
    %cst = arith.constant 1.000000e+00 : f32
    %cst_1 = arith.constant 0.000000e+00 : f32
    %5 = vector.broadcast %cst : f32 to vector<128x128xf32>
    %6 = vector.broadcast %cst_1 : f32 to vector<128x128xf32>
    %7 = arith.select %4, %5, %6 : vector<128x128xi1>, vector<128x128xf32>
    %8 = arith.truncf %7 : vector<128x128xf32> to vector<128x128xbf16>
    %c0_2 = arith.constant 0 : index
    %c0_3 = arith.constant 0 : index
    %c0_4 = arith.constant 0 : index
    %9 = vector.load %arg2[%c0_2, %c0_3, %c0_4] : memref<5x128x128xbf16, #tpu.memory_space<vmem>>, vector<1x128x128xbf16>
    %10 = vector.shape_cast %9 : vector<1x128x128xbf16> to vector<128x128xbf16>
    %cst_5 = arith.constant dense<0.000000e+00> : vector<128x128xf32>
    %11 = tpu.matmul %8, %10, %cst_5 {dimension_numbers = #tpu.dot_dimension_numbers<[1], [0], [0], [1], [0, 0, 1, 1], [], []>} : vector<128x128xbf16>, vector<128x128xbf16>, vector<128x128xf32> -> vector<128x128xf32>
    %12 = vector.extract_strided_slice %0 {offsets = [0, 1], sizes = [128, 1], strides = [1, 1]} : vector<128x5xi32> to vector<128x1xi32>
    %13 = vector.broadcast %12 : vector<128x1xi32> to vector<128x128xi32>
    %14 = arith.cmpi eq, %13, %1 : vector<128x128xi32>
    %cst_6 = arith.constant 1.000000e+00 : f32
    %cst_7 = arith.constant 0.000000e+00 : f32
    %15 = vector.broadcast %cst_6 : f32 to vector<128x128xf32>
    %16 = vector.broadcast %cst_7 : f32 to vector<128x128xf32>
    %17 = arith.select %14, %15, %16 : vector<128x128xi1>, vector<128x128xf32>
    %18 = arith.truncf %17 : vector<128x128xf32> to vector<128x128xbf16>
    %c1 = arith.constant 1 : index
    %c0_8 = arith.constant 0 : index
    %c0_9 = arith.constant 0 : index
    %19 = vector.load %arg2[%c1, %c0_8, %c0_9] : memref<5x128x128xbf16, #tpu.memory_space<vmem>>, vector<1x128x128xbf16>
    %20 = vector.shape_cast %19 : vector<1x128x128xbf16> to vector<128x128xbf16>
    %cst_10 = arith.constant dense<0.000000e+00> : vector<128x128xf32>
    %21 = tpu.matmul %18, %20, %cst_10 {dimension_numbers = #tpu.dot_dimension_numbers<[1], [0], [0], [1], [0, 0, 1, 1], [], []>} : vector<128x128xbf16>, vector<128x128xbf16>, vector<128x128xf32> -> vector<128x128xf32>
    %22 = arith.addf %11, %21 : vector<128x128xf32>
    %23 = vector.extract_strided_slice %0 {offsets = [0, 2], sizes = [128, 1], strides = [1, 1]} : vector<128x5xi32> to vector<128x1xi32>
    %24 = vector.broadcast %23 : vector<128x1xi32> to vector<128x128xi32>
    %25 = arith.cmpi eq, %24, %1 : vector<128x128xi32>
    %cst_11 = arith.constant 1.000000e+00 : f32
    %cst_12 = arith.constant 0.000000e+00 : f32
    %26 = vector.broadcast %cst_11 : f32 to vector<128x128xf32>
    %27 = vector.broadcast %cst_12 : f32 to vector<128x128xf32>
    %28 = arith.select %25, %26, %27 : vector<128x128xi1>, vector<128x128xf32>
    %29 = arith.truncf %28 : vector<128x128xf32> to vector<128x128xbf16>
    %c2 = arith.constant 2 : index
    %c0_13 = arith.constant 0 : index
    %c0_14 = arith.constant 0 : index
    %30 = vector.load %arg2[%c2, %c0_13, %c0_14] : memref<5x128x128xbf16, #tpu.memory_space<vmem>>, vector<1x128x128xbf16>
    %31 = vector.shape_cast %30 : vector<1x128x128xbf16> to vector<128x128xbf16>
    %cst_15 = arith.constant dense<0.000000e+00> : vector<128x128xf32>
    %32 = tpu.matmul %29, %31, %cst_15 {dimension_numbers = #tpu.dot_dimension_numbers<[1], [0], [0], [1], [0, 0, 1, 1], [], []>} : vector<128x128xbf16>, vector<128x128xbf16>, vector<128x128xf32> -> vector<128x128xf32>
    %33 = arith.addf %22, %32 : vector<128x128xf32>
    %34 = vector.extract_strided_slice %0 {offsets = [0, 3], sizes = [128, 1], strides = [1, 1]} : vector<128x5xi32> to vector<128x1xi32>
    %35 = vector.broadcast %34 : vector<128x1xi32> to vector<128x128xi32>
    %36 = arith.cmpi eq, %35, %1 : vector<128x128xi32>
    %cst_16 = arith.constant 1.000000e+00 : f32
    %cst_17 = arith.constant 0.000000e+00 : f32
    %37 = vector.broadcast %cst_16 : f32 to vector<128x128xf32>
    %38 = vector.broadcast %cst_17 : f32 to vector<128x128xf32>
    %39 = arith.select %36, %37, %38 : vector<128x128xi1>, vector<128x128xf32>
    %40 = arith.truncf %39 : vector<128x128xf32> to vector<128x128xbf16>
    %c3 = arith.constant 3 : index
    %c0_18 = arith.constant 0 : index
    %c0_19 = arith.constant 0 : index
    %41 = vector.load %arg2[%c3, %c0_18, %c0_19] : memref<5x128x128xbf16, #tpu.memory_space<vmem>>, vector<1x128x128xbf16>
    %42 = vector.shape_cast %41 : vector<1x128x128xbf16> to vector<128x128xbf16>
    %cst_20 = arith.constant dense<0.000000e+00> : vector<128x128xf32>
    %43 = tpu.matmul %40, %42, %cst_20 {dimension_numbers = #tpu.dot_dimension_numbers<[1], [0], [0], [1], [0, 0, 1, 1], [], []>} : vector<128x128xbf16>, vector<128x128xbf16>, vector<128x128xf32> -> vector<128x128xf32>
    %44 = arith.addf %33, %43 : vector<128x128xf32>
    %45 = vector.extract_strided_slice %0 {offsets = [0, 4], sizes = [128, 1], strides = [1, 1]} : vector<128x5xi32> to vector<128x1xi32>
    %46 = vector.broadcast %45 : vector<128x1xi32> to vector<128x128xi32>
    %47 = arith.cmpi eq, %46, %1 : vector<128x128xi32>
    %cst_21 = arith.constant 1.000000e+00 : f32
    %cst_22 = arith.constant 0.000000e+00 : f32
    %48 = vector.broadcast %cst_21 : f32 to vector<128x128xf32>
    %49 = vector.broadcast %cst_22 : f32 to vector<128x128xf32>
    %50 = arith.select %47, %48, %49 : vector<128x128xi1>, vector<128x128xf32>
    %51 = arith.truncf %50 : vector<128x128xf32> to vector<128x128xbf16>
    %c4 = arith.constant 4 : index
    %c0_23 = arith.constant 0 : index
    %c0_24 = arith.constant 0 : index
    %52 = vector.load %arg2[%c4, %c0_23, %c0_24] : memref<5x128x128xbf16, #tpu.memory_space<vmem>>, vector<1x128x128xbf16>
    %53 = vector.shape_cast %52 : vector<1x128x128xbf16> to vector<128x128xbf16>
    %cst_25 = arith.constant dense<0.000000e+00> : vector<128x128xf32>
    %54 = tpu.matmul %51, %53, %cst_25 {dimension_numbers = #tpu.dot_dimension_numbers<[1], [0], [0], [1], [0, 0, 1, 1], [], []>} : vector<128x128xbf16>, vector<128x128xbf16>, vector<128x128xf32> -> vector<128x128xf32>
    %55 = arith.addf %44, %54 : vector<128x128xf32>
    %56 = vector.shape_cast %55 : vector<128x128xf32> to vector<8x16x128xf32>
    %c0_26 = arith.constant 0 : index
    %c0_27 = arith.constant 0 : index
    %57 = vector.load %arg3[%c0_26, %c0_27] : memref<1x128xf32, #tpu.memory_space<vmem>>, vector<1x128xf32>
    %58 = vector.shape_cast %57 : vector<1x128xf32> to vector<1x1x128xf32>
    %59 = vector.broadcast %58 : vector<1x1x128xf32> to vector<8x16x128xf32>
    %60 = arith.addf %56, %59 : vector<8x16x128xf32>
    %c0_28 = arith.constant 0 : index
    %c0_29 = arith.constant 0 : index
    %61 = vector.load %arg4[%c0_28, %c0_29] : memref<16x128xf32, #tpu.memory_space<vmem>>, vector<16x128xf32>
    %62 = vector.shape_cast %61 : vector<16x128xf32> to vector<1x16x128xf32>
    %63 = vector.broadcast %62 : vector<1x16x128xf32> to vector<8x16x128xf32>
    %64 = arith.mulf %60, %63 : vector<8x16x128xf32>
    %cst_30 = arith.constant 0.000000e+00 : f32
    %65 = vector.broadcast %cst_30 : f32 to vector<8x16x128xf32>
    %66 = arith.maximumf %64, %65 : vector<8x16x128xf32>
    %cst_31 = arith.constant dense<0xFF800000> : vector<8x128xf32>
    %67 = vector.multi_reduction <maximumf>, %66, %cst_31 [1] : vector<8x16x128xf32> to vector<8x128xf32>
    %c0_32 = arith.constant 0 : index
    %c0_33 = arith.constant 0 : index
    %68 = vector.load %arg5[%c0_32, %c0_33] : memref<8x128xf32, #tpu.memory_space<vmem>>, vector<8x128xf32>
    %69 = tpu.transpose %67, [1, 0] : vector<8x128xf32> -> vector<128x8xf32>
    %cst_34 = arith.constant dense<0.000000e+00> : vector<8x8xf32>
    %70 = tpu.matmul %68, %69, %cst_34 {dimension_numbers = #tpu.dot_dimension_numbers<[1], [0], [0], [1], [0, 0, 1, 1], [], []>} : vector<8x128xf32>, vector<128x8xf32>, vector<8x8xf32> -> vector<8x8xf32>
    %c0_35 = arith.constant 0 : index
    %c0_36 = arith.constant 0 : index
    %71 = vector.load %arg6[%c0_35, %c0_36] : memref<1x1xf32, #tpu.memory_space<vmem>>, vector<1x1xf32>
    %72 = vector.broadcast %71 : vector<1x1xf32> to vector<8x8xf32>
    %73 = arith.addf %70, %72 : vector<8x8xf32>
    %74 = arith.negf %73 : vector<8x8xf32>
    %75 = math.exp %74 : vector<8x8xf32>
    %cst_37 = arith.constant 1.000000e+00 : f32
    %76 = vector.broadcast %cst_37 : f32 to vector<8x8xf32>
    %77 = arith.addf %76, %75 : vector<8x8xf32>
    %78 = arith.divf %76, %77 : vector<8x8xf32>
    %79 = vector.shape_cast %78 : vector<8x8xf32> to vector<1x8x8xf32>
    %c0_38 = arith.constant 0 : index
    %c0_39 = arith.constant 0 : index
    %c0_40 = arith.constant 0 : index
    %80 = vector.load %arg7[%c0_38, %c0_39, %c0_40] : memref<1x8x8xf32, #tpu.memory_space<vmem>>, vector<1x8x8xf32>
    tpu.vector_store %arg7[%c0_38, %c0_39, %c0_40], %79 {strides = array<i32>} : memref<1x8x8xf32, #tpu.memory_space<vmem>>, vector<1x8x8xf32>,
    return
  }
  func.func @transform_0(%arg0: i32) -> (i32, i32) {
    %c0_i32 = arith.constant 0 : i32
    %c0_i32_0 = arith.constant 0 : i32
    return %arg0, %c0_i32 : i32, i32
  }
  func.func @transform_1(%arg0: i32) -> (i32, i32, i32) {
    %c0_i32 = arith.constant 0 : i32
    %c0_i32_0 = arith.constant 0 : i32
    %c0_i32_1 = arith.constant 0 : i32
    %c0_i32_2 = arith.constant 0 : i32
    return %c0_i32, %c0_i32_0, %c0_i32_1 : i32, i32, i32
  }
  func.func @transform_2(%arg0: i32) -> (i32, i32) {
    %c0_i32 = arith.constant 0 : i32
    %c0_i32_0 = arith.constant 0 : i32
    %c0_i32_1 = arith.constant 0 : i32
    return %c0_i32, %c0_i32_0 : i32, i32
  }
  func.func @transform_3(%arg0: i32) -> (i32, i32) {
    %c0_i32 = arith.constant 0 : i32
    %c0_i32_0 = arith.constant 0 : i32
    %c0_i32_1 = arith.constant 0 : i32
    return %c0_i32, %c0_i32_0 : i32, i32
  }
  func.func @transform_4(%arg0: i32) -> (i32, i32) {
    %c0_i32 = arith.constant 0 : i32
    %c0_i32_0 = arith.constant 0 : i32
    %c0_i32_1 = arith.constant 0 : i32
    return %c0_i32, %c0_i32_0 : i32, i32
  }
  func.func @transform_5(%arg0: i32) -> (i32, i32) {
    %c0_i32 = arith.constant 0 : i32
    %c0_i32_0 = arith.constant 0 : i32
    %c0_i32_1 = arith.constant 0 : i32
    return %c0_i32, %c0_i32_0 : i32, i32
  }
  func.func @transform_6(%arg0: i32) -> (i32, i32, i32) {
    %c0_i32 = arith.constant 0 : i32
    %c0_i32_0 = arith.constant 0 : i32
    %c0_i32_1 = arith.constant 0 : i32
    return %arg0, %c0_i32, %c0_i32_0 : i32, i32, i32
  }
}

</mosaic_0001>

<llo_original>
// kernel: tpu_custom_call.1
$region0: #{tpu_custom_call.1}
  #allocation0 [shape = 'u32[]', space=smem, size = 0x4, offset = 0x4, fixed_abs, tag = 'smem constant byte address 0x4 - core index']
  #allocation1 [shape = 'u32[144,128]{1,0:T(1,128)}', space=vmem, size = 0x12000, scoped, tag = 'internal scratch']
  #allocation2 [shape = 'f32[1,1]{1,0:T(1,128)S(1)}', space=vmem, size = 0x200, scoped, tag = 'scoped memory for tpu_custom_call.1']
  %s0 = inlined_call_operand.vmem [shape: s32[256,5], index: 0, kind: input, shape index: {}]
  %s1 = inlined_call_operand.hbm [shape: bf16[5,128,128], index: 1, kind: input, shape index: {}]
  %s2 = inlined_call_operand.vmem [shape: f32[1,128], index: 2, kind: input, shape index: {}]
  %s3 = inlined_call_operand.vmem [shape: f32[16,128], index: 3, kind: input, shape index: {}]
  %s4 = inlined_call_operand.vmem [shape: f32[8,128], index: 4, kind: input, shape index: {}]
  %s5 = inlined_call_operand.<no memory space> [shape: f32[1,1], index: 5, kind: input, shape index: {}]
  %s6 = inlined_call_operand.hbm [shape: f32[2,8,8], index: 6, kind: output, shape index: {}]
  %s7 = sld [smem:[#allocation0]]
  $region61: #{tpu_custom_call.1} parent=0
    _
  %s9 = ssub.s32 1, %s7
  %s10 = scalar_select 0, %s9, %s7
  %v11 = vstv %s5
  %12 = vst [vmem:[#allocation2] sm:$0x1] %v11
  $region1: #{tpu_custom_call.1} parent=0
    #allocation3 [shape = 'u8[163840]{0}', space=vmem, size = 0x28000, scoped, tag = 'input window, operand 1, single buffered']
    #allocation4 [shape = 's32[2]{0}', space=sflag, size = 0x8, scoped, tag = 'scoped memory for tpu_custom_call.1']
    #allocation5 [shape = 's32[2]{0}', space=sflag, size = 0x8, scoped, tag = 'scoped memory for tpu_custom_call.1']
    #allocation6 [shape = 'u8[8192]{0}', space=vmem, size = 0x2000, scoped, tag = 'output window, operand 0']
    %13 = vsyncpa [#allocation4], 0
    %14 = vsyncpa [#allocation5], 0
    %s15 = scalar_lea.sflag [#allocation5], 1
    %16 = vsyncpa %s15, 0
    loop: start=0, step=1, limit=4
    $region2: #{tpu_custom_call.1} parent=1 // loop_pre_header
      _
    $region3: #{tpu_custom_call.1} parent=1 // loop_header
      %s18 = sphi 0, %s22
      %p19 = scmp.ge.s32.totalorder %s18, 4
      %s28 = sphi 0, %s30
      %s31 = sphi 0, %s28
      %s32 = sphi 0, %s31
      %s48 = sphi 0, %s32
      %s52 = sphi 0, %s52
      %s54 = sphi 0, %s52
      %s55 = sphi 0, %s54
      %s69 = sphi 0, %s55
      %s73 = sphi 0, %s73
      %s75 = sphi 0, %s73
      %s76 = sphi 0, %s75
      %s90 = sphi 0, %s76
      %s94 = sphi 0, %s94
      %s96 = sphi 0, %s94
      %s97 = sphi 0, %s96
      %s111 = sphi 0, %s97
      %s115 = sphi 0, %s115
      %s117 = sphi 0, %s115
      %s118 = sphi 0, %s117
      %s132 = sphi 0, %s118
      %s136 = sphi 0, %s136
      %s138 = sphi 0, %s136
      %s139 = sphi 0, %s138
      %s153 = sphi 0, %s139
      %s159 = sphi 0, %s161
      %s162 = sphi 0, %s159
      %s163 = sphi 0, %s162
      %s179 = sphi 0, %s163
    $region4: #{tpu_custom_call.1} parent=1 // loop_header_branch
      %21 = sbr.rel (%p19) target = $region8
    $region5: #{tpu_custom_call.1} parent=1 // loop_body
      %s23 = ssub.s32 %s18, 1
      %s24 = ssub.s32 %s18, 2
      %s25 = sadd.s32 %s18, 1
      %s26 = ssub.s32 %s18, %s25
      %p27 = scmp.eq.s32.totalorder %s26, 0
      %s29 = sadd.s32 %s28, 1
      %s30 = scalar_select %p27, %s28, %s29
      %p33 = pneg %p27
      %p34 = scmp.eq.s32.totalorder %s18, 1
      %p35 = por %p33, %p34
      %p36 = scmp.ne.s32.totalorder %s28, %s31
      %p37 = scmp.eq.s32.totalorder %s18, 0
      %p38 = por %p36, %p37
      %p39 = scmp.ne.s32.totalorder %s28, %s31
      %p40 = scmp.eq.s32.totalorder %s23, 1
      %p41 = por %p39, %p40
      %p42 = scmp.ne.s32.totalorder %s31, %s32
      %p43 = scmp.eq.s32.totalorder %s23, 0
      %p44 = por %p42, %p43
      %p45 = scmp.ne.s32.totalorder %s31, %s32
      %p46 = scmp.eq.s32.totalorder %s24, 1
      %p47 = por %p45, %p46
      %p49 = scmp.ne.s32.totalorder %s32, %s48
      %p50 = scmp.eq.s32.totalorder %s24, 0
      %p51 = por %p49, %p50
      %s53 = sadd.s32 %s52, 1
      %p56 = scmp.eq.s32.totalorder %s18, 1
      %p57 = scmp.ne.s32.totalorder %s52, %s54
      %p58 = scmp.eq.s32.totalorder %s18, 0
      %p59 = por %p57, %p58
      %p60 = scmp.ne.s32.totalorder %s52, %s54
      %p61 = scmp.eq.s32.totalorder %s23, 1
      %p62 = por %p60, %p61
      %p63 = scmp.ne.s32.totalorder %s54, %s55
      %p64 = scmp.eq.s32.totalorder %s23, 0
      %p65 = por %p63, %p64
      %p66 = scmp.ne.s32.totalorder %s54, %s55
      %p67 = scmp.eq.s32.totalorder %s24, 1
      %p68 = por %p66, %p67
      %p70 = scmp.ne.s32.totalorder %s55, %s69
      %p71 = scmp.eq.s32.totalorder %s24, 0
      %p72 = por %p70, %p71
      %s74 = sadd.s32 %s73, 1
      %p77 = scmp.eq.s32.totalorder %s18, 1
      %p78 = scmp.ne.s32.totalorder %s73, %s75
      %p79 = scmp.eq.s32.totalorder %s18, 0
      %p80 = por %p78, %p79
      %p81 = scmp.ne.s32.totalorder %s73, %s75
      %p82 = scmp.eq.s32.totalorder %s23, 1
      %p83 = por %p81, %p82
      %p84 = scmp.ne.s32.totalorder %s75, %s76
      %p85 = scmp.eq.s32.totalorder %s23, 0
      %p86 = por %p84, %p85
      %p87 = scmp.ne.s32.totalorder %s75, %s76
      %p88 = scmp.eq.s32.totalorder %s24, 1
      %p89 = por %p87, %p88
      %p91 = scmp.ne.s32.totalorder %s76, %s90
      %p92 = scmp.eq.s32.totalorder %s24, 0
      %p93 = por %p91, %p92
      %s95 = sadd.s32 %s94, 1
      %p98 = scmp.eq.s32.totalorder %s18, 1
      %p99 = scmp.ne.s32.totalorder %s94, %s96
      %p100 = scmp.eq.s32.totalorder %s18, 0
      %p101 = por %p99, %p100
      %p102 = scmp.ne.s32.totalorder %s94, %s96
      %p103 = scmp.eq.s32.totalorder %s23, 1
      %p104 = por %p102, %p103
      %p105 = scmp.ne.s32.totalorder %s96, %s97
      %p106 = scmp.eq.s32.totalorder %s23, 0
      %p107 = por %p105, %p106
      %p108 = scmp.ne.s32.totalorder %s96, %s97
      %p109 = scmp.eq.s32.totalorder %s24, 1
      %p110 = por %p108, %p109
      %p112 = scmp.ne.s32.totalorder %s97, %s111
      %p113 = scmp.eq.s32.totalorder %s24, 0
      %p114 = por %p112, %p113
      %s116 = sadd.s32 %s115, 1
      %p119 = scmp.eq.s32.totalorder %s18, 1
      %p120 = scmp.ne.s32.totalorder %s115, %s117
      %p121 = scmp.eq.s32.totalorder %s18, 0
      %p122 = por %p120, %p121
      %p123 = scmp.ne.s32.totalorder %s115, %s117
      %p124 = scmp.eq.s32.totalorder %s23, 1
      %p125 = por %p123, %p124
      %p126 = scmp.ne.s32.totalorder %s117, %s118
      %p127 = scmp.eq.s32.totalorder %s23, 0
      %p128 = por %p126, %p127
      %p129 = scmp.ne.s32.totalorder %s117, %s118
      %p130 = scmp.eq.s32.totalorder %s24, 1
      %p131 = por %p129, %p130
      %p133 = scmp.ne.s32.totalorder %s118, %s132
      %p134 = scmp.eq.s32.totalorder %s24, 0
      %p135 = por %p133, %p134
      %s137 = sadd.s32 %s136, 1
      %p140 = scmp.eq.s32.totalorder %s18, 1
      %p141 = scmp.ne.s32.totalorder %s136, %s138
      %p142 = scmp.eq.s32.totalorder %s18, 0
      %p143 = por %p141, %p142
      %p144 = scmp.ne.s32.totalorder %s136, %s138
      %p145 = scmp.eq.s32.totalorder %s23, 1
      %p146 = por %p144, %p145
      %p147 = scmp.ne.s32.totalorder %s138, %s139
      %p148 = scmp.eq.s32.totalorder %s23, 0
      %p149 = por %p147, %p148
      %p150 = scmp.ne.s32.totalorder %s138, %s139
      %p151 = scmp.eq.s32.totalorder %s24, 1
      %p152 = por %p150, %p151
      %p154 = scmp.ne.s32.totalorder %s139, %s153
      %p155 = scmp.eq.s32.totalorder %s24, 0
      %p156 = por %p154, %p155
      %s157 = ssub.s32 %s18, %s25
      %p158 = scmp.eq.s32.totalorder %s157, 0
      %s160 = sadd.s32 %s159, 1
      %s161 = scalar_select %p158, %s159, %s160
      %p164 = pneg %p158
      %p165 = scmp.eq.s32.totalorder %s18, 1
      %p166 = por %p164, %p165
      %p167 = scmp.ne.s32.totalorder %s159, %s162
      %p168 = scmp.eq.s32.totalorder %s18, 0
      %p169 = por %p167, %p168
      %p170 = scmp.ne.s32.totalorder %s159, %s162
      %p171 = scmp.eq.s32.totalorder %s23, 1
      %p172 = por %p170, %p171
      %p173 = scmp.ne.s32.totalorder %s162, %s163
      %p174 = scmp.eq.s32.totalorder %s23, 0
      %p175 = por %p173, %p174
      %p176 = scmp.ne.s32.totalorder %s162, %s163
      %p177 = scmp.eq.s32.totalorder %s24, 1
      %p178 = por %p176, %p177
      %p180 = scmp.ne.s32.totalorder %s163, %s179
      %p181 = scmp.eq.s32.totalorder %s24, 0
      %p182 = por %p180, %p181
      %p183 = scmp.le.s32.totalorder 1, %s18
      %p184 = scmp.lt.s32.totalorder %s18, 3
      %p185 = pnand %p183, %p184
      %p186 = pneg %p185
      // Predicated region
      $region9: #{tpu_custom_call.1} parent=5 // pred_check
        _
      $region10: #{tpu_custom_call.1} parent=5 // pred_check_branch
        %188 = sbr.rel (%p185) target = $region12
      $region11: #{tpu_custom_call.1} parent=5 // pred_region
        %s189 = ssub.s32 %s18, 1
        // Predicated region
        $region13: #{tpu_custom_call.1} parent=11 // pred_check
          %p190 = pneg %p65
        $region14: #{tpu_custom_call.1} parent=11 // pred_check_branch
          %192 = sbr.rel (%p190) target = $region16
        $region15: #{tpu_custom_call.1} parent=11 // pred_region
          %s194 = ssub.s32 5120, 5120
          %195 = vsyncadd [#allocation4], %s194
          %s196 = sshll.u32 [#allocation3], 4
          %s197 = int_to_ptr.vmem [resolvable:$true] %s196
          %202 = dma.hbm_to_vmem [thread:$0]  %s1, 5120, %s197, [#allocation4], 64, 64, 4
        $region16: #{tpu_custom_call.1} parent=11 // pred_fallthru
          _
        // Predicated region
        $region17: #{tpu_custom_call.1} parent=11 // pred_check
          %p203 = pneg %p86
        $region18: #{tpu_custom_call.1} parent=11 // pred_check_branch
          %205 = sbr.rel (%p203) target = $region20
        $region19: #{tpu_custom_call.1} parent=11 // pred_region
          _
        $region20: #{tpu_custom_call.1} parent=11 // pred_fallthru
          _
        // Predicated region
        $region21: #{tpu_custom_call.1} parent=11 // pred_check
          %p206 = pneg %p107
        $region22: #{tpu_custom_call.1} parent=11 // pred_check_branch
          %208 = sbr.rel (%p206) target = $region24
        $region23: #{tpu_custom_call.1} parent=11 // pred_region
          _
        $region24: #{tpu_custom_call.1} parent=11 // pred_fallthru
          _
        // Predicated region
        $region25: #{tpu_custom_call.1} parent=11 // pred_check
          %p209 = pneg %p128
        $region26: #{tpu_custom_call.1} parent=11 // pred_check_branch
          %211 = sbr.rel (%p209) target = $region28
        $region27: #{tpu_custom_call.1} parent=11 // pred_region
          _
        $region28: #{tpu_custom_call.1} parent=11 // pred_fallthru
          _
        // Predicated region
        $region29: #{tpu_custom_call.1} parent=11 // pred_check
          %p212 = pneg %p149
        $region30: #{tpu_custom_call.1} parent=11 // pred_check_branch
          %214 = sbr.rel (%p212) target = $region32
        $region31: #{tpu_custom_call.1} parent=11 // pred_region
          _
        $region32: #{tpu_custom_call.1} parent=11 // pred_fallthru
          _
      $region12: #{tpu_custom_call.1} parent=5 // pred_fallthru
        _
      %p215 = scmp.lt.s32.totalorder %s18, 2
      // Predicated region
      $region33: #{tpu_custom_call.1} parent=5 // pred_check
        %p216 = pneg %p215
      $region34: #{tpu_custom_call.1} parent=5 // pred_check_branch
        %218 = sbr.rel (%p216) target = $region36
      $region35: #{tpu_custom_call.1} parent=5 // pred_region
        // Predicated region
        $region37: #{tpu_custom_call.1} parent=35 // pred_check
          %p219 = pneg %p38
        $region38: #{tpu_custom_call.1} parent=35 // pred_check_branch
          %221 = sbr.rel (%p219) target = $region40
        $region39: #{tpu_custom_call.1} parent=35 // pred_region
          %s222 = smul.u32 16, %s18
          %p223 = scmp.lt.s32.totalorder %s222, 31
          %s224 = scalar_select %p223, %s222, 31
          %s225 = smul.addr %s224, 8
          %s226 = scalar_lea.vmem %s0, %s225
          %s227 = smul.u32 16, %s18
        $region40: #{tpu_custom_call.1} parent=35 // pred_fallthru
          _
      $region36: #{tpu_custom_call.1} parent=5 // pred_fallthru
        _
      %p228 = scmp.le.s32.totalorder 1, %s18
      %p229 = scmp.lt.s32.totalorder %s18, 3
      %p230 = pnand %p228, %p229
      %p231 = pneg %p230
      // Predicated region
      $region41: #{tpu_custom_call.1} parent=5 // pred_check
        _
      $region42: #{tpu_custom_call.1} parent=5 // pred_check_branch
        %233 = sbr.rel (%p230) target = $region44
      $region43: #{tpu_custom_call.1} parent=5 // pred_region
        %s234 = ssub.s32 %s18, 1
        // Predicated region
        $region45: #{tpu_custom_call.1} parent=43 // pred_check
          %p235 = pneg %p65
        $region46: #{tpu_custom_call.1} parent=43 // pred_check_branch
          %237 = sbr.rel (%p235) target = $region48
        $region47: #{tpu_custom_call.1} parent=43 // pred_region
          %238 = dma.done [#allocation4], 5120
        $region48: #{tpu_custom_call.1} parent=43 // pred_fallthru
          _
        %s239 = smul.u32 16, %s23
        %p240 = scmp.lt.s32.totalorder %s239, 31
        %s241 = scalar_select %p240, %s239, 31
        %s242 = smul.addr %s241, 8
        %s243 = scalar_lea.vmem %s0, %s242
        %p244 = pneg %p44
        %p245 = pneg %p41
        %p246 = pneg %p65
        %p247 = pneg %p62
        %p248 = pneg %p86
        %p249 = pneg %p83
        %p250 = pneg %p107
        %p251 = pneg %p104
        %p252 = pneg %p128
        %p253 = pneg %p125
        %p254 = pneg %p149
        %p255 = pneg %p146
        %p256 = pneg %p175
        %p257 = pneg %p172
        %s258 = sand.u32 %s162, 1
        %s259 = scalar_lea.sflag [#allocation5], %s258
        %s260 = sand.u32 %s162, 1
        %s261 = smul.addr %s260, 8
        %s262 = scalar_lea.vmem [#allocation6], %s261
        %s263 = smul.u32 16, %s23
        %p264 = scmp.lt.s32.totalorder %s263, 31
        %s265 = scalar_select %p264, %s263, 31
        %s266 = smul.addr %s265, 8
        %s267 = scalar_lea.vmem %s0, %s266
        %s268 = smul.u32 16, %s23
        %v270 = vld [vmem:[%s267] sm:$0xff]
        %v271 = vld [vmem:[%s267 + $0x8] sm:$0xff]
        %v272 = vld [vmem:[%s267 + $0x10] sm:$0xff]
        %v273 = vld [vmem:[%s267 + $0x18] sm:$0xff]
        %v274 = vld [vmem:[%s267 + $0x20] sm:$0xff]
        %v275 = vld [vmem:[%s267 + $0x28] sm:$0xff]
        %v276 = vld [vmem:[%s267 + $0x30] sm:$0xff]
        %v277 = vld [vmem:[%s267 + $0x38] sm:$0xff]
        %v278 = vld [vmem:[%s267 + $0x40] sm:$0xff]
        %v279 = vld [vmem:[%s267 + $0x48] sm:$0xff]
        %v280 = vld [vmem:[%s267 + $0x50] sm:$0xff]
        %v281 = vld [vmem:[%s267 + $0x58] sm:$0xff]
        %v282 = vld [vmem:[%s267 + $0x60] sm:$0xff]
        %v283 = vld [vmem:[%s267 + $0x68] sm:$0xff]
        %v284 = vld [vmem:[%s267 + $0x70] sm:$0xff]
        %v285 = vld [vmem:[%s267 + $0x78] sm:$0xff]
        %v286 = vlaneseq
        %v287 = vand.u32 %v286, 127
        %288 = vset.pattern.permute.xlu0 0
        %289 = vperm.xlu0 %288, %v270
        %v290 = vpop.permute.xlu0 %289
        %291 = vset.pattern.permute.xlu0 0
        %292 = vperm.xlu0 %291, %v271
        %v293 = vpop.permute.xlu0 %292
        %294 = vset.pattern.permute.xlu0 0
        %295 = vperm.xlu0 %294, %v272
        %v296 = vpop.permute.xlu0 %295
        %297 = vset.pattern.permute.xlu0 0
        %298 = vperm.xlu0 %297, %v273
        %v299 = vpop.permute.xlu0 %298
        %300 = vset.pattern.permute.xlu0 0
        %301 = vperm.xlu0 %300, %v274
        %v302 = vpop.permute.xlu0 %301
        %303 = vset.pattern.permute.xlu0 0
        %304 = vperm.xlu0 %303, %v275
        %v305 = vpop.permute.xlu0 %304
        %306 = vset.pattern.permute.xlu0 0
        %307 = vperm.xlu0 %306, %v276
        %v308 = vpop.permute.xlu0 %307
        %309 = vset.pattern.permute.xlu0 0
        %310 = vperm.xlu0 %309, %v277
        %v311 = vpop.permute.xlu0 %310
        %312 = vset.pattern.permute.xlu0 0
        %313 = vperm.xlu0 %312, %v278
        %v314 = vpop.permute.xlu0 %313
        %315 = vset.pattern.permute.xlu0 0
        %316 = vperm.xlu0 %315, %v279
        %v317 = vpop.permute.xlu0 %316
        %318 = vset.pattern.permute.xlu0 0
        %319 = vperm.xlu0 %318, %v280
        %v320 = vpop.permute.xlu0 %319
        %321 = vset.pattern.permute.xlu0 0
        %322 = vperm.xlu0 %321, %v281
        %v323 = vpop.permute.xlu0 %322
        %324 = vset.pattern.permute.xlu0 0
        %325 = vperm.xlu0 %324, %v282
        %v326 = vpop.permute.xlu0 %325
        %327 = vset.pattern.permute.xlu0 0
        %328 = vperm.xlu0 %327, %v283
        %v329 = vpop.permute.xlu0 %328
        %330 = vset.pattern.permute.xlu0 0
        %331 = vperm.xlu0 %330, %v284
        %v332 = vpop.permute.xlu0 %331
        %333 = vset.pattern.permute.xlu0 0
        %334 = vperm.xlu0 %333, %v285
        %v335 = vpop.permute.xlu0 %334
        %vm336 = vcmp.eq.s32.totalorder %v290, %v287
        %vm337 = vcmp.eq.s32.totalorder %v293, %v287
        %vm338 = vcmp.eq.s32.totalorder %v296, %v287
        %vm339 = vcmp.eq.s32.totalorder %v299, %v287
        %vm340 = vcmp.eq.s32.totalorder %v302, %v287
        %vm341 = vcmp.eq.s32.totalorder %v305, %v287
        %vm342 = vcmp.eq.s32.totalorder %v308, %v287
        %vm343 = vcmp.eq.s32.totalorder %v311, %v287
        %vm344 = vcmp.eq.s32.totalorder %v314, %v287
        %vm345 = vcmp.eq.s32.totalorder %v317, %v287
        %vm346 = vcmp.eq.s32.totalorder %v320, %v287
        %vm347 = vcmp.eq.s32.totalorder %v323, %v287
        %vm348 = vcmp.eq.s32.totalorder %v326, %v287
        %vm349 = vcmp.eq.s32.totalorder %v329, %v287
        %vm350 = vcmp.eq.s32.totalorder %v332, %v287
        %vm351 = vcmp.eq.s32.totalorder %v335, %v287
        %v352 = vsel %vm336, 1.0, 0.0
        %v353 = vsel %vm337, 1.0, 0.0
        %v354 = vsel %vm338, 1.0, 0.0
        %v355 = vsel %vm339, 1.0, 0.0
        %v356 = vsel %vm340, 1.0, 0.0
        %v357 = vsel %vm341, 1.0, 0.0
        %v358 = vsel %vm342, 1.0, 0.0
        %v359 = vsel %vm343, 1.0, 0.0
        %v360 = vsel %vm344, 1.0, 0.0
        %v361 = vsel %vm345, 1.0, 0.0
        %v362 = vsel %vm346, 1.0, 0.0
        %v363 = vsel %vm347, 1.0, 0.0
        %v364 = vsel %vm348, 1.0, 0.0
        %v365 = vsel %vm349, 1.0, 0.0
        %v366 = vsel %vm350, 1.0, 0.0
        %v367 = vsel %vm351, 1.0, 0.0
        %v368 = vpack.c.bf16 %v353, %v352
        %v369 = vpack.c.bf16 %v355, %v354
        %v370 = vpack.c.bf16 %v357, %v356
        %v371 = vpack.c.bf16 %v359, %v358
        %v372 = vpack.c.bf16 %v361, %v360
        %v373 = vpack.c.bf16 %v363, %v362
        %v374 = vpack.c.bf16 %v365, %v364
        %v375 = vpack.c.bf16 %v367, %v366
        %v376 = vld [vmem:[#allocation3] sm:$0xf]
        %v377 = vld [vmem:[#allocation3 + $0x4] sm:$0xf]
        %v378 = vld [vmem:[#allocation3 + $0x8] sm:$0xf]
        %v379 = vld [vmem:[#allocation3 + $0xc] sm:$0xf]
        %v380 = vld [vmem:[#allocation3 + $0x10] sm:$0xf]
        %v381 = vld [vmem:[#allocation3 + $0x14] sm:$0xf]
        %v382 = vld [vmem:[#allocation3 + $0x18] sm:$0xf]
        %v383 = vld [vmem:[#allocation3 + $0x1c] sm:$0xf]
        %v384 = vld [vmem:[#allocation3 + $0x20] sm:$0xf]
        %v385 = vld [vmem:[#allocation3 + $0x24] sm:$0xf]
        %v386 = vld [vmem:[#allocation3 + $0x28] sm:$0xf]
        %v387 = vld [vmem:[#allocation3 + $0x2c] sm:$0xf]
        %v388 = vld [vmem:[#allocation3 + $0x30] sm:$0xf]
        %v389 = vld [vmem:[#allocation3 + $0x34] sm:$0xf]
        %v390 = vld [vmem:[#allocation3 + $0x38] sm:$0xf]
        %v391 = vld [vmem:[#allocation3 + $0x3c] sm:$0xf]
        %392 = vset.pattern.permute.xlu0 1
        %393 = vperm.xlu0 %392, %v270
        %v394 = vpop.permute.xlu0 %393
        %395 = vset.pattern.permute.xlu0 1
        %396 = vperm.xlu0 %395, %v271
        %v397 = vpop.permute.xlu0 %396
        %398 = vset.pattern.permute.xlu0 1
        %399 = vperm.xlu0 %398, %v272
        %v400 = vpop.permute.xlu0 %399
        %401 = vset.pattern.permute.xlu0 1
        %402 = vperm.xlu0 %401, %v273
        %v403 = vpop.permute.xlu0 %402
        %404 = vset.pattern.permute.xlu0 1
        %405 = vperm.xlu0 %404, %v274
        %v406 = vpop.permute.xlu0 %405
        %407 = vset.pattern.permute.xlu0 1
        %408 = vperm.xlu0 %407, %v275
        %v409 = vpop.permute.xlu0 %408
        %410 = vset.pattern.permute.xlu0 1
        %411 = vperm.xlu0 %410, %v276
        %v412 = vpop.permute.xlu0 %411
        %413 = vset.pattern.permute.xlu0 1
        %414 = vperm.xlu0 %413, %v277
        %v415 = vpop.permute.xlu0 %414
        %416 = vset.pattern.permute.xlu0 1
        %417 = vperm.xlu0 %416, %v278
        %v418 = vpop.permute.xlu0 %417
        %419 = vset.pattern.permute.xlu0 1
        %420 = vperm.xlu0 %419, %v279
        %v421 = vpop.permute.xlu0 %420
        %422 = vset.pattern.permute.xlu0 1
        %423 = vperm.xlu0 %422, %v280
        %v424 = vpop.permute.xlu0 %423
        %425 = vset.pattern.permute.xlu0 1
        %426 = vperm.xlu0 %425, %v281
        %v427 = vpop.permute.xlu0 %426
        %428 = vset.pattern.permute.xlu0 1
        %429 = vperm.xlu0 %428, %v282
        %v430 = vpop.permute.xlu0 %429
        %431 = vset.pattern.permute.xlu0 1
        %432 = vperm.xlu0 %431, %v283
        %v433 = vpop.permute.xlu0 %432
        %434 = vset.pattern.permute.xlu0 1
        %435 = vperm.xlu0 %434, %v284
        %v436 = vpop.permute.xlu0 %435
        %437 = vset.pattern.permute.xlu0 1
        %438 = vperm.xlu0 %437, %v285
        %v439 = vpop.permute.xlu0 %438
        %vm440 = vcmp.eq.s32.totalorder %v394, %v287
        %vm441 = vcmp.eq.s32.totalorder %v397, %v287
        %vm442 = vcmp.eq.s32.totalorder %v400, %v287
        %vm443 = vcmp.eq.s32.totalorder %v403, %v287
        %vm444 = vcmp.eq.s32.totalorder %v406, %v287
        %vm445 = vcmp.eq.s32.totalorder %v409, %v287
        %vm446 = vcmp.eq.s32.totalorder %v412, %v287
        %vm447 = vcmp.eq.s32.totalorder %v415, %v287
        %vm448 = vcmp.eq.s32.totalorder %v418, %v287
        %vm449 = vcmp.eq.s32.totalorder %v421, %v287
        %vm450 = vcmp.eq.s32.totalorder %v424, %v287
        %vm451 = vcmp.eq.s32.totalorder %v427, %v287
        %vm452 = vcmp.eq.s32.totalorder %v430, %v287
        %vm453 = vcmp.eq.s32.totalorder %v433, %v287
        %vm454 = vcmp.eq.s32.totalorder %v436, %v287
        %vm455 = vcmp.eq.s32.totalorder %v439, %v287
        %v456 = vsel %vm440, 1.0, 0.0
        %v457 = vsel %vm441, 1.0, 0.0
        %v458 = vsel %vm442, 1.0, 0.0
        %v459 = vsel %vm443, 1.0, 0.0
        %v460 = vsel %vm444, 1.0, 0.0
        %v461 = vsel %vm445, 1.0, 0.0
        %v462 = vsel %vm446, 1.0, 0.0
        %v463 = vsel %vm447, 1.0, 0.0
        %v464 = vsel %vm448, 1.0, 0.0
        %v465 = vsel %vm449, 1.0, 0.0
        %v466 = vsel %vm450, 1.0, 0.0
        %v467 = vsel %vm451, 1.0, 0.0
        %v468 = vsel %vm452, 1.0, 0.0
        %v469 = vsel %vm453, 1.0, 0.0
        %v470 = vsel %vm454, 1.0, 0.0
        %v471 = vsel %vm455, 1.0, 0.0
        %v472 = vpack.c.bf16 %v457, %v456
        %v473 = vpack.c.bf16 %v459, %v458
        %v474 = vpack.c.bf16 %v461, %v460
        %v475 = vpack.c.bf16 %v463, %v462
        %v476 = vpack.c.bf16 %v465, %v464
        %v477 = vpack.c.bf16 %v467, %v466
        %v478 = vpack.c.bf16 %v469, %v468
        %v479 = vpack.c.bf16 %v471, %v470
        %s480 = scalar_lea.vmem [#allocation3], 64
        %v481 = vld [vmem:[%s480] sm:$0xf]
        %v482 = vld [vmem:[%s480 + $0x4] sm:$0xf]
        %v483 = vld [vmem:[%s480 + $0x8] sm:$0xf]
        %v484 = vld [vmem:[%s480 + $0xc] sm:$0xf]
        %v485 = vld [vmem:[%s480 + $0x10] sm:$0xf]
        %v486 = vld [vmem:[%s480 + $0x14] sm:$0xf]
        %v487 = vld [vmem:[%s480 + $0x18] sm:$0xf]
        %v488 = vld [vmem:[%s480 + $0x1c] sm:$0xf]
        %v489 = vld [vmem:[%s480 + $0x20] sm:$0xf]
        %v490 = vld [vmem:[%s480 + $0x24] sm:$0xf]
        %v491 = vld [vmem:[%s480 + $0x28] sm:$0xf]
        %v492 = vld [vmem:[%s480 + $0x2c] sm:$0xf]
        %v493 = vld [vmem:[%s480 + $0x30] sm:$0xf]
        %v494 = vld [vmem:[%s480 + $0x34] sm:$0xf]
        %v495 = vld [vmem:[%s480 + $0x38] sm:$0xf]
        %v496 = vld [vmem:[%s480 + $0x3c] sm:$0xf]
        %v513 = vunpack.c.l.b16 %v481
        %v514 = vunpack.c.l.b16 %v482
        %v515 = vunpack.c.l.b16 %v483
        %v516 = vunpack.c.l.b16 %v484
        %v517 = vunpack.c.l.b16 %v485
        %v518 = vunpack.c.l.b16 %v486
        %v519 = vunpack.c.l.b16 %v487
        %v520 = vunpack.c.l.b16 %v488
        %v521 = vunpack.c.l.b16 %v489
        %v522 = vunpack.c.l.b16 %v490
        %v523 = vunpack.c.l.b16 %v491
        %v524 = vunpack.c.l.b16 %v492
        %v525 = vunpack.c.l.b16 %v493
        %v526 = vunpack.c.l.b16 %v494
        %v527 = vunpack.c.l.b16 %v495
        %v528 = vunpack.c.l.b16 %v496
        %v529 = vpack.c.b16 %v514, %v513
        %v530 = vpack.c.b16 %v516, %v515
        %v531 = vpack.c.b16 %v518, %v517
        %v532 = vpack.c.b16 %v520, %v519
        %v533 = vpack.c.b16 %v522, %v521
        %v534 = vpack.c.b16 %v524, %v523
        %v535 = vpack.c.b16 %v526, %v525
        %v536 = vpack.c.b16 %v528, %v527
        %545 = vmatprep.subr.bf16.mxu0 0
        %546 = vmatpush1.bf16.msra.mxu0 %v529
        %547 = vmatprep.subr.bf16.mxu0 0
        %548 = vmatpush1.bf16.msra.mxu0 %v530
        %549 = vmatprep.subr.bf16.mxu0 0
        %550 = vmatpush1.bf16.msra.mxu0 %v531
        %551 = vmatprep.subr.bf16.mxu0 0
        %552 = vmatpush1.bf16.msra.mxu0 %v532
        %553 = vmatprep.subr.bf16.mxu0 0
        %554 = vmatpush1.bf16.msra.mxu0 %v533
        %555 = vmatprep.subr.bf16.mxu0 0
        %556 = vmatpush1.bf16.msra.mxu0 %v534
        %557 = vmatprep.subr.bf16.mxu0 0
        %558 = vmatpush1.bf16.msra.mxu0 %v535
        %559 = vmatprep.subr.bf16.mxu0 0
        %560 = vmatpush1.bf16.msra.mxu0 %v536
        %561 = vmatprep.subr.bf16.mxu0 0
        %562 = vmatpush1.bf16.msra.mxu0 0
        %563 = vmatprep.subr.bf16.mxu0 0
        %564 = vmatpush1.bf16.msra.mxu0 0
        %565 = vmatprep.subr.bf16.mxu0 0
        %566 = vmatpush1.bf16.msra.mxu0 0
        %567 = vmatprep.subr.bf16.mxu0 0
        %568 = vmatpush1.bf16.msra.mxu0 0
        %569 = vmatprep.subr.bf16.mxu0 0
        %570 = vmatpush1.bf16.msra.mxu0 0
        %571 = vmatprep.subr.bf16.mxu0 0
        %572 = vmatpush1.bf16.msra.mxu0 0
        %573 = vmatprep.subr.bf16.mxu0 0
        %574 = vmatpush1.bf16.msra.mxu0 0
        %575 = vmatprep.subr.bf16.mxu0 0
        %576 = vmatpush1.bf16.msra.mxu0 0
        %577 = vmatprep.mubr.bf16.mxu0 0
        %578 = vmatmul.mubr.bf16.gmra.mrb[0].mxu0 %v472
        %v579 = vpop.f32.mrb[0].mxu0
        %v580 = vadd.f32 0.0, %v579
        %v581 = vpop.f32.mrb[0].mxu0
        %v582 = vpop.f32.mrb[0].mxu0
        %v583 = vadd.f32 0.0, %v582
        %v584 = vpop.f32.mrb[0].mxu0
        %585 = vmatprep.mubr.bf16.mxu0 0
        %586 = vmatmul.mubr.bf16.gmra.mrb[0].mxu0 %v473
        %v587 = vpop.f32.mrb[0].mxu0
        %v588 = vadd.f32 0.0, %v587
        %v589 = vpop.f32.mrb[0].mxu0
        %v590 = vpop.f32.mrb[0].mxu0
        %v591 = vadd.f32 0.0, %v590
        %v592 = vpop.f32.mrb[0].mxu0
        %593 = vmatprep.mubr.bf16.mxu0 0
        %594 = vmatmul.mubr.bf16.gmra.mrb[0].mxu0 %v474
        %v595 = vpop.f32.mrb[0].mxu0
        %v596 = vadd.f32 0.0, %v595
        %v597 = vpop.f32.mrb[0].mxu0
        %v598 = vpop.f32.mrb[0].mxu0
        %v599 = vadd.f32 0.0, %v598
        %v600 = vpop.f32.mrb[0].mxu0
        %601 = vmatprep.mubr.bf16.mxu0 0
        %602 = vmatmul.mubr.bf16.gmra.mrb[0].mxu0 %v475
        %v603 = vpop.f32.mrb[0].mxu0
        %v604 = vadd.f32 0.0, %v603
        %v605 = vpop.f32.mrb[0].mxu0
        %v606 = vpop.f32.mrb[0].mxu0
        %v607 = vadd.f32 0.0, %v606
        %v608 = vpop.f32.mrb[0].mxu0
        %609 = vmatprep.mubr.bf16.mxu0 0
        %610 = vmatmul.mubr.bf16.gmra.mrb[0].mxu0 %v476
        %v611 = vpop.f32.mrb[0].mxu0
        %v612 = vadd.f32 0.0, %v611
        %v613 = vpop.f32.mrb[0].mxu0
        %v614 = vpop.f32.mrb[0].mxu0
        %v615 = vadd.f32 0.0, %v614
        %v616 = vpop.f32.mrb[0].mxu0
        %617 = vmatprep.mubr.bf16.mxu0 0
        %618 = vmatmul.mubr.bf16.gmra.mrb[0].mxu0 %v477
        %v619 = vpop.f32.mrb[0].mxu0
        %v620 = vadd.f32 0.0, %v619
        %v621 = vpop.f32.mrb[0].mxu0
        %v622 = vpop.f32.mrb[0].mxu0
        %v623 = vadd.f32 0.0, %v622
        %v624 = vpop.f32.mrb[0].mxu0
        %625 = vmatprep.mubr.bf16.mxu0 0
        %626 = vmatmul.mubr.bf16.gmra.mrb[0].mxu0 %v478
        %v627 = vpop.f32.mrb[0].mxu0
        %v628 = vadd.f32 0.0, %v627
        %v629 = vpop.f32.mrb[0].mxu0
        %v630 = vpop.f32.mrb[0].mxu0
        %v631 = vadd.f32 0.0, %v630
        %v632 = vpop.f32.mrb[0].mxu0
        %633 = vmatprep.mubr.bf16.mxu0 0
        %634 = vmatmul.mubr.bf16.gmra.mrb[0].mxu0 %v479
        %v635 = vpop.f32.mrb[0].mxu0
        %v636 = vadd.f32 0.0, %v635
        %v637 = vpop.f32.mrb[0].mxu0
        %v638 = vpop.f32.mrb[0].mxu0
        %v639 = vadd.f32 0.0, %v638
        %v640 = vpop.f32.mrb[0].mxu0
        %641 = vdwg.mxu0
        %v658 = vunpack.c.l.b16 %v376
        %v659 = vunpack.c.l.b16 %v377
        %v660 = vunpack.c.l.b16 %v378
        %v661 = vunpack.c.l.b16 %v379
        %v662 = vunpack.c.l.b16 %v380
        %v663 = vunpack.c.l.b16 %v381
        %v664 = vunpack.c.l.b16 %v382
        %v665 = vunpack.c.l.b16 %v383
        %v666 = vunpack.c.l.b16 %v384
        %v667 = vunpack.c.l.b16 %v385
        %v668 = vunpack.c.l.b16 %v386
        %v669 = vunpack.c.l.b16 %v387
        %v670 = vunpack.c.l.b16 %v388
        %v671 = vunpack.c.l.b16 %v389
        %v672 = vunpack.c.l.b16 %v390
        %v673 = vunpack.c.l.b16 %v391
        %v674 = vpack.c.b16 %v659, %v658
        %v675 = vpack.c.b16 %v661, %v660
        %v676 = vpack.c.b16 %v663, %v662
        %v677 = vpack.c.b16 %v665, %v664
        %v678 = vpack.c.b16 %v667, %v666
        %v679 = vpack.c.b16 %v669, %v668
        %v680 = vpack.c.b16 %v671, %v670
        %v681 = vpack.c.b16 %v673, %v672
        %690 = vmatprep.subr.bf16.mxu0 0
        %691 = vmatpush1.bf16.msra.mxu0 %v674
        %692 = vmatprep.subr.bf16.mxu0 0
        %693 = vmatpush1.bf16.msra.mxu0 %v675
        %694 = vmatprep.subr.bf16.mxu0 0
        %695 = vmatpush1.bf16.msra.mxu0 %v676
        %696 = vmatprep.subr.bf16.mxu0 0
        %697 = vmatpush1.bf16.msra.mxu0 %v677
        %698 = vmatprep.subr.bf16.mxu0 0
        %699 = vmatpush1.bf16.msra.mxu0 %v678
        %700 = vmatprep.subr.bf16.mxu0 0
        %701 = vmatpush1.bf16.msra.mxu0 %v679
        %702 = vmatprep.subr.bf16.mxu0 0
        %703 = vmatpush1.bf16.msra.mxu0 %v680
        %704 = vmatprep.subr.bf16.mxu0 0
        %705 = vmatpush1.bf16.msra.mxu0 %v681
        %706 = vmatprep.subr.bf16.mxu0 0
        %707 = vmatpush1.bf16.msra.mxu0 0
        %708 = vmatprep.subr.bf16.mxu0 0
        %709 = vmatpush1.bf16.msra.mxu0 0
        %710 = vmatprep.subr.bf16.mxu0 0
        %711 = vmatpush1.bf16.msra.mxu0 0
        %712 = vmatprep.subr.bf16.mxu0 0
        %713 = vmatpush1.bf16.msra.mxu0 0
        %714 = vmatprep.subr.bf16.mxu0 0
        %715 = vmatpush1.bf16.msra.mxu0 0
        %716 = vmatprep.subr.bf16.mxu0 0
        %717 = vmatpush1.bf16.msra.mxu0 0
        %718 = vmatprep.subr.bf16.mxu0 0
        %719 = vmatpush1.bf16.msra.mxu0 0
        %720 = vmatprep.subr.bf16.mxu0 0
        %721 = vmatpush1.bf16.msra.mxu0 0
        %722 = vmatprep.mubr.bf16.mxu0 0
        %723 = vmatmul.mubr.bf16.gmra.mrb[0].mxu0 %v368
        %v724 = vpop.f32.mrb[0].mxu0
        %v725 = vadd.f32 %v580, %v724
        %v726 = vpop.f32.mrb[0].mxu0
        %v727 = vpop.f32.mrb[0].mxu0
        %v728 = vadd.f32 %v583, %v727
        %v729 = vpop.f32.mrb[0].mxu0
        %730 = vmatprep.mubr.bf16.mxu0 0
        %731 = vmatmul.mubr.bf16.gmra.mrb[0].mxu0 %v369
        %v732 = vpop.f32.mrb[0].mxu0
        %v733 = vadd.f32 %v588, %v732
        %v734 = vpop.f32.mrb[0].mxu0
        %v735 = vpop.f32.mrb[0].mxu0
        %v736 = vadd.f32 %v591, %v735
        %v737 = vpop.f32.mrb[0].mxu0
        %738 = vmatprep.mubr.bf16.mxu0 0
        %739 = vmatmul.mubr.bf16.gmra.mrb[0].mxu0 %v370
        %v740 = vpop.f32.mrb[0].mxu0
        %v741 = vadd.f32 %v596, %v740
        %v742 = vpop.f32.mrb[0].mxu0
        %v743 = vpop.f32.mrb[0].mxu0
        %v744 = vadd.f32 %v599, %v743
        %v745 = vpop.f32.mrb[0].mxu0
        %746 = vmatprep.mubr.bf16.mxu0 0
        %747 = vmatmul.mubr.bf16.gmra.mrb[0].mxu0 %v371
        %v748 = vpop.f32.mrb[0].mxu0
        %v749 = vadd.f32 %v604, %v748
        %v750 = vpop.f32.mrb[0].mxu0
        %v751 = vpop.f32.mrb[0].mxu0
        %v752 = vadd.f32 %v607, %v751
        %v753 = vpop.f32.mrb[0].mxu0
        %754 = vmatprep.mubr.bf16.mxu0 0
        %755 = vmatmul.mubr.bf16.gmra.mrb[0].mxu0 %v372
        %v756 = vpop.f32.mrb[0].mxu0
        %v757 = vadd.f32 %v612, %v756
        %v758 = vpop.f32.mrb[0].mxu0
        %v759 = vpop.f32.mrb[0].mxu0
        %v760 = vadd.f32 %v615, %v759
        %v761 = vpop.f32.mrb[0].mxu0
        %762 = vmatprep.mubr.bf16.mxu0 0
        %763 = vmatmul.mubr.bf16.gmra.mrb[0].mxu0 %v373
        %v764 = vpop.f32.mrb[0].mxu0
        %v765 = vadd.f32 %v620, %v764
        %v766 = vpop.f32.mrb[0].mxu0
        %v767 = vpop.f32.mrb[0].mxu0
        %v768 = vadd.f32 %v623, %v767
        %v769 = vpop.f32.mrb[0].mxu0
        %770 = vmatprep.mubr.bf16.mxu0 0
        %771 = vmatmul.mubr.bf16.gmra.mrb[0].mxu0 %v374
        %v772 = vpop.f32.mrb[0].mxu0
        %v773 = vadd.f32 %v628, %v772
        %v774 = vpop.f32.mrb[0].mxu0
        %v775 = vpop.f32.mrb[0].mxu0
        %v776 = vadd.f32 %v631, %v775
        %v777 = vpop.f32.mrb[0].mxu0
        %778 = vmatprep.mubr.bf16.mxu0 0
        %779 = vmatmul.mubr.bf16.gmra.mrb[0].mxu0 %v375
        %v780 = vpop.f32.mrb[0].mxu0
        %v781 = vadd.f32 %v636, %v780
        %v782 = vpop.f32.mrb[0].mxu0
        %v783 = vpop.f32.mrb[0].mxu0
        %v784 = vadd.f32 %v639, %v783
        %v785 = vpop.f32.mrb[0].mxu0
        %786 = vdwg.mxu0
        %787 = vset.pattern.permute.xlu0 2
        %788 = vperm.xlu0 %787, %v270
        %v789 = vpop.permute.xlu0 %788
        %790 = vset.pattern.permute.xlu0 2
        %791 = vperm.xlu0 %790, %v271
        %v792 = vpop.permute.xlu0 %791
        %793 = vset.pattern.permute.xlu0 2
        %794 = vperm.xlu0 %793, %v272
        %v795 = vpop.permute.xlu0 %794
        %796 = vset.pattern.permute.xlu0 2
        %797 = vperm.xlu0 %796, %v273
        %v798 = vpop.permute.xlu0 %797
        %799 = vset.pattern.permute.xlu0 2
        %800 = vperm.xlu0 %799, %v274
        %v801 = vpop.permute.xlu0 %800
        %802 = vset.pattern.permute.xlu0 2
        %803 = vperm.xlu0 %802, %v275
        %v804 = vpop.permute.xlu0 %803
        %805 = vset.pattern.permute.xlu0 2
        %806 = vperm.xlu0 %805, %v276
        %v807 = vpop.permute.xlu0 %806
        %808 = vset.pattern.permute.xlu0 2
        %809 = vperm.xlu0 %808, %v277
        %v810 = vpop.permute.xlu0 %809
        %811 = vset.pattern.permute.xlu0 2
        %812 = vperm.xlu0 %811, %v278
        %v813 = vpop.permute.xlu0 %812
        %814 = vset.pattern.permute.xlu0 2
        %815 = vperm.xlu0 %814, %v279
        %v816 = vpop.permute.xlu0 %815
        %817 = vset.pattern.permute.xlu0 2
        %818 = vperm.xlu0 %817, %v280
        %v819 = vpop.permute.xlu0 %818
        %820 = vset.pattern.permute.xlu0 2
        %821 = vperm.xlu0 %820, %v281
        %v822 = vpop.permute.xlu0 %821
        %823 = vset.pattern.permute.xlu0 2
        %824 = vperm.xlu0 %823, %v282
        %v825 = vpop.permute.xlu0 %824
        %826 = vset.pattern.permute.xlu0 2
        %827 = vperm.xlu0 %826, %v283
        %v828 = vpop.permute.xlu0 %827
        %829 = vset.pattern.permute.xlu0 2
        %830 = vperm.xlu0 %829, %v284
        %v831 = vpop.permute.xlu0 %830
        %832 = vset.pattern.permute.xlu0 2
        %833 = vperm.xlu0 %832, %v285
        %v834 = vpop.permute.xlu0 %833
        %vm835 = vcmp.eq.s32.totalorder %v789, %v287
        %vm836 = vcmp.eq.s32.totalorder %v792, %v287
        %vm837 = vcmp.eq.s32.totalorder %v795, %v287
        %vm838 = vcmp.eq.s32.totalorder %v798, %v287
        %vm839 = vcmp.eq.s32.totalorder %v801, %v287
        %vm840 = vcmp.eq.s32.totalorder %v804, %v287
        %vm841 = vcmp.eq.s32.totalorder %v807, %v287
        %vm842 = vcmp.eq.s32.totalorder %v810, %v287
        %vm843 = vcmp.eq.s32.totalorder %v813, %v287
        %vm844 = vcmp.eq.s32.totalorder %v816, %v287
        %vm845 = vcmp.eq.s32.totalorder %v819, %v287
        %vm846 = vcmp.eq.s32.totalorder %v822, %v287
        %vm847 = vcmp.eq.s32.totalorder %v825, %v287
        %vm848 = vcmp.eq.s32.totalorder %v828, %v287
        %vm849 = vcmp.eq.s32.totalorder %v831, %v287
        %vm850 = vcmp.eq.s32.totalorder %v834, %v287
        %v851 = vsel %vm835, 1.0, 0.0
        %v852 = vsel %vm836, 1.0, 0.0
        %v853 = vsel %vm837, 1.0, 0.0
        %v854 = vsel %vm838, 1.0, 0.0
        %v855 = vsel %vm839, 1.0, 0.0
        %v856 = vsel %vm840, 1.0, 0.0
        %v857 = vsel %vm841, 1.0, 0.0
        %v858 = vsel %vm842, 1.0, 0.0
        %v859 = vsel %vm843, 1.0, 0.0
        %v860 = vsel %vm844, 1.0, 0.0
        %v861 = vsel %vm845, 1.0, 0.0
        %v862 = vsel %vm846, 1.0, 0.0
        %v863 = vsel %vm847, 1.0, 0.0
        %v864 = vsel %vm848, 1.0, 0.0
        %v865 = vsel %vm849, 1.0, 0.0
        %v866 = vsel %vm850, 1.0, 0.0
        %v867 = vpack.c.bf16 %v852, %v851
        %v868 = vpack.c.bf16 %v854, %v853
        %v869 = vpack.c.bf16 %v856, %v855
        %v870 = vpack.c.bf16 %v858, %v857
        %v871 = vpack.c.bf16 %v860, %v859
        %v872 = vpack.c.bf16 %v862, %v861
        %v873 = vpack.c.bf16 %v864, %v863
        %v874 = vpack.c.bf16 %v866, %v865
        %s875 = scalar_lea.vmem [#allocation3], 128
        %v876 = vld [vmem:[%s875] sm:$0xf]
        %v877 = vld [vmem:[%s875 + $0x4] sm:$0xf]
        %v878 = vld [vmem:[%s875 + $0x8] sm:$0xf]
        %v879 = vld [vmem:[%s875 + $0xc] sm:$0xf]
        %v880 = vld [vmem:[%s875 + $0x10] sm:$0xf]
        %v881 = vld [vmem:[%s875 + $0x14] sm:$0xf]
        %v882 = vld [vmem:[%s875 + $0x18] sm:$0xf]
        %v883 = vld [vmem:[%s875 + $0x1c] sm:$0xf]
        %v884 = vld [vmem:[%s875 + $0x20] sm:$0xf]
        %v885 = vld [vmem:[%s875 + $0x24] sm:$0xf]
        %v886 = vld [vmem:[%s875 + $0x28] sm:$0xf]
        %v887 = vld [vmem:[%s875 + $0x2c] sm:$0xf]
        %v888 = vld [vmem:[%s875 + $0x30] sm:$0xf]
        %v889 = vld [vmem:[%s875 + $0x34] sm:$0xf]
        %v890 = vld [vmem:[%s875 + $0x38] sm:$0xf]
        %v891 = vld [vmem:[%s875 + $0x3c] sm:$0xf]
        %v908 = vunpack.c.l.b16 %v876
        %v909 = vunpack.c.l.b16 %v877
        %v910 = vunpack.c.l.b16 %v878
        %v911 = vunpack.c.l.b16 %v879
        %v912 = vunpack.c.l.b16 %v880
        %v913 = vunpack.c.l.b16 %v881
        %v914 = vunpack.c.l.b16 %v882
        %v915 = vunpack.c.l.b16 %v883
        %v916 = vunpack.c.l.b16 %v884
        %v917 = vunpack.c.l.b16 %v885
        %v918 = vunpack.c.l.b16 %v886
        %v919 = vunpack.c.l.b16 %v887
        %v920 = vunpack.c.l.b16 %v888
        %v921 = vunpack.c.l.b16 %v889
        %v922 = vunpack.c.l.b16 %v890
        %v923 = vunpack.c.l.b16 %v891
        %v924 = vpack.c.b16 %v909, %v908
        %v925 = vpack.c.b16 %v911, %v910
        %v926 = vpack.c.b16 %v913, %v912
        %v927 = vpack.c.b16 %v915, %v914
        %v928 = vpack.c.b16 %v917, %v916
        %v929 = vpack.c.b16 %v919, %v918
        %v930 = vpack.c.b16 %v921, %v920
        %v931 = vpack.c.b16 %v923, %v922
        %940 = vmatprep.subr.bf16.mxu0 0
        %941 = vmatpush1.bf16.msra.mxu0 %v924
        %942 = vmatprep.subr.bf16.mxu0 0
        %943 = vmatpush1.bf16.msra.mxu0 %v925
        %944 = vmatprep.subr.bf16.mxu0 0
        %945 = vmatpush1.bf16.msra.mxu0 %v926
        %946 = vmatprep.subr.bf16.mxu0 0
        %947 = vmatpush1.bf16.msra.mxu0 %v927
        %948 = vmatprep.subr.bf16.mxu0 0
        %949 = vmatpush1.bf16.msra.mxu0 %v928
        %950 = vmatprep.subr.bf16.mxu0 0
        %951 = vmatpush1.bf16.msra.mxu0 %v929
        %952 = vmatprep.subr.bf16.mxu0 0
        %953 = vmatpush1.bf16.msra.mxu0 %v930
        %954 = vmatprep.subr.bf16.mxu0 0
        %955 = vmatpush1.bf16.msra.mxu0 %v931
        %956 = vmatprep.subr.bf16.mxu0 0
        %957 = vmatpush1.bf16.msra.mxu0 0
        %958 = vmatprep.subr.bf16.mxu0 0
        %959 = vmatpush1.bf16.msra.mxu0 0
        %960 = vmatprep.subr.bf16.mxu0 0
        %961 = vmatpush1.bf16.msra.mxu0 0
        %962 = vmatprep.subr.bf16.mxu0 0
        %963 = vmatpush1.bf16.msra.mxu0 0
        %964 = vmatprep.subr.bf16.mxu0 0
        %965 = vmatpush1.bf16.msra.mxu0 0
        %966 = vmatprep.subr.bf16.mxu0 0
        %967 = vmatpush1.bf16.msra.mxu0 0
        %968 = vmatprep.subr.bf16.mxu0 0
        %969 = vmatpush1.bf16.msra.mxu0 0
        %970 = vmatprep.subr.bf16.mxu0 0
        %971 = vmatpush1.bf16.msra.mxu0 0
        %972 = vmatprep.mubr.bf16.mxu0 0
        %973 = vmatmul.mubr.bf16.gmra.mrb[0].mxu0 %v867
        %v974 = vpop.f32.mrb[0].mxu0
        %v975 = vadd.f32 0.0, %v974
        %v976 = vpop.f32.mrb[0].mxu0
        %v977 = vpop.f32.mrb[0].mxu0
        %v978 = vadd.f32 0.0, %v977
        %v979 = vpop.f32.mrb[0].mxu0
        %980 = vmatprep.mubr.bf16.mxu0 0
        %981 = vmatmul.mubr.bf16.gmra.mrb[0].mxu0 %v868
        %v982 = vpop.f32.mrb[0].mxu0
        %v983 = vadd.f32 0.0, %v982
        %v984 = vpop.f32.mrb[0].mxu0
        %v985 = vpop.f32.mrb[0].mxu0
        %v986 = vadd.f32 0.0, %v985
        %v987 = vpop.f32.mrb[0].mxu0
        %988 = vmatprep.mubr.bf16.mxu0 0
        %989 = vmatmul.mubr.bf16.gmra.mrb[0].mxu0 %v869
        %v990 = vpop.f32.mrb[0].mxu0
        %v991 = vadd.f32 0.0, %v990
        %v992 = vpop.f32.mrb[0].mxu0
        %v993 = vpop.f32.mrb[0].mxu0
        %v994 = vadd.f32 0.0, %v993
        %v995 = vpop.f32.mrb[0].mxu0
        %996 = vmatprep.mubr.bf16.mxu0 0
        %997 = vmatmul.mubr.bf16.gmra.mrb[0].mxu0 %v870
        %v998 = vpop.f32.mrb[0].mxu0
        %v999 = vadd.f32 0.0, %v998
        %v1000 = vpop.f32.mrb[0].mxu0
        %v1001 = vpop.f32.mrb[0].mxu0
        %v1002 = vadd.f32 0.0, %v1001
        %v1003 = vpop.f32.mrb[0].mxu0
        %1004 = vmatprep.mubr.bf16.mxu0 0
        %1005 = vmatmul.mubr.bf16.gmra.mrb[0].mxu0 %v871
        %v1006 = vpop.f32.mrb[0].mxu0
        %v1007 = vadd.f32 0.0, %v1006
        %v1008 = vpop.f32.mrb[0].mxu0
        %v1009 = vpop.f32.mrb[0].mxu0
        %v1010 = vadd.f32 0.0, %v1009
        %v1011 = vpop.f32.mrb[0].mxu0
        %1012 = vmatprep.mubr.bf16.mxu0 0
        %1013 = vmatmul.mubr.bf16.gmra.mrb[0].mxu0 %v872
        %v1014 = vpop.f32.mrb[0].mxu0
        %v1015 = vadd.f32 0.0, %v1014
        %v1016 = vpop.f32.mrb[0].mxu0
        %v1017 = vpop.f32.mrb[0].mxu0
        %v1018 = vadd.f32 0.0, %v1017
        %v1019 = vpop.f32.mrb[0].mxu0
        %1020 = vmatprep.mubr.bf16.mxu0 0
        %1021 = vmatmul.mubr.bf16.gmra.mrb[0].mxu0 %v873
        %v1022 = vpop.f32.mrb[0].mxu0
        %v1023 = vadd.f32 0.0, %v1022
        %v1024 = vpop.f32.mrb[0].mxu0
        %v1025 = vpop.f32.mrb[0].mxu0
        %v1026 = vadd.f32 0.0, %v1025
        %v1027 = vpop.f32.mrb[0].mxu0
        %1028 = vmatprep.mubr.bf16.mxu0 0
        %1029 = vmatmul.mubr.bf16.gmra.mrb[0].mxu0 %v874
        %v1030 = vpop.f32.mrb[0].mxu0
        %v1031 = vadd.f32 0.0, %v1030
        %v1032 = vpop.f32.mrb[0].mxu0
        %v1033 = vpop.f32.mrb[0].mxu0
        %v1034 = vadd.f32 0.0, %v1033
        %v1035 = vpop.f32.mrb[0].mxu0
        %1036 = vdwg.mxu0
        %v1037 = vadd.f32 %v725, %v975
        %v1038 = vadd.f32 %v728, %v978
        %v1039 = vadd.f32 %v733, %v983
        %v1040 = vadd.f32 %v736, %v986
        %v1041 = vadd.f32 %v741, %v991
        %v1042 = vadd.f32 %v744, %v994
        %v1043 = vadd.f32 %v749, %v999
        %v1044 = vadd.f32 %v752, %v1002
        %v1045 = vadd.f32 %v757, %v1007
        %v1046 = vadd.f32 %v760, %v1010
        %v1047 = vadd.f32 %v765, %v1015
        %v1048 = vadd.f32 %v768, %v1018
        %v1049 = vadd.f32 %v773, %v1023
        %v1050 = vadd.f32 %v776, %v1026
        %v1051 = vadd.f32 %v781, %v1031
        %v1052 = vadd.f32 %v784, %v1034
        %1053 = vset.pattern.permute.xlu0 3
        %1054 = vperm.xlu0 %1053, %v270
        %v1055 = vpop.permute.xlu0 %1054
        %1056 = vset.pattern.permute.xlu0 3
        %1057 = vperm.xlu0 %1056, %v271
        %v1058 = vpop.permute.xlu0 %1057
        %1059 = vset.pattern.permute.xlu0 3
        %1060 = vperm.xlu0 %1059, %v272
        %v1061 = vpop.permute.xlu0 %1060
        %1062 = vset.pattern.permute.xlu0 3
        %1063 = vperm.xlu0 %1062, %v273
        %v1064 = vpop.permute.xlu0 %1063
        %1065 = vset.pattern.permute.xlu0 3
        %1066 = vperm.xlu0 %1065, %v274
        %v1067 = vpop.permute.xlu0 %1066
        %1068 = vset.pattern.permute.xlu0 3
        %1069 = vperm.xlu0 %1068, %v275
        %v1070 = vpop.permute.xlu0 %1069
        %1071 = vset.pattern.permute.xlu0 3
        %1072 = vperm.xlu0 %1071, %v276
        %v1073 = vpop.permute.xlu0 %1072
        %1074 = vset.pattern.permute.xlu0 3
        %1075 = vperm.xlu0 %1074, %v277
        %v1076 = vpop.permute.xlu0 %1075
        %1077 = vset.pattern.permute.xlu0 3
        %1078 = vperm.xlu0 %1077, %v278
        %v1079 = vpop.permute.xlu0 %1078
        %1080 = vset.pattern.permute.xlu0 3
        %1081 = vperm.xlu0 %1080, %v279
        %v1082 = vpop.permute.xlu0 %1081
        %1083 = vset.pattern.permute.xlu0 3
        %1084 = vperm.xlu0 %1083, %v280
        %v1085 = vpop.permute.xlu0 %1084
        %1086 = vset.pattern.permute.xlu0 3
        %1087 = vperm.xlu0 %1086, %v281
        %v1088 = vpop.permute.xlu0 %1087
        %1089 = vset.pattern.permute.xlu0 3
        %1090 = vperm.xlu0 %1089, %v282
        %v1091 = vpop.permute.xlu0 %1090
        %1092 = vset.pattern.permute.xlu0 3
        %1093 = vperm.xlu0 %1092, %v283
        %v1094 = vpop.permute.xlu0 %1093
        %1095 = vset.pattern.permute.xlu0 3
        %1096 = vperm.xlu0 %1095, %v284
        %v1097 = vpop.permute.xlu0 %1096
        %1098 = vset.pattern.permute.xlu0 3
        %1099 = vperm.xlu0 %1098, %v285
        %v1100 = vpop.permute.xlu0 %1099
        %vm1101 = vcmp.eq.s32.totalorder %v1055, %v287
        %vm1102 = vcmp.eq.s32.totalorder %v1058, %v287
        %vm1103 = vcmp.eq.s32.totalorder %v1061, %v287
        %vm1104 = vcmp.eq.s32.totalorder %v1064, %v287
        %vm1105 = vcmp.eq.s32.totalorder %v1067, %v287
        %vm1106 = vcmp.eq.s32.totalorder %v1070, %v287
        %vm1107 = vcmp.eq.s32.totalorder %v1073, %v287
        %vm1108 = vcmp.eq.s32.totalorder %v1076, %v287
        %vm1109 = vcmp.eq.s32.totalorder %v1079, %v287
        %vm1110 = vcmp.eq.s32.totalorder %v1082, %v287
        %vm1111 = vcmp.eq.s32.totalorder %v1085, %v287
        %vm1112 = vcmp.eq.s32.totalorder %v1088, %v287
        %vm1113 = vcmp.eq.s32.totalorder %v1091, %v287
        %vm1114 = vcmp.eq.s32.totalorder %v1094, %v287
        %vm1115 = vcmp.eq.s32.totalorder %v1097, %v287
        %vm1116 = vcmp.eq.s32.totalorder %v1100, %v287
        %v1117 = vsel %vm1101, 1.0, 0.0
        %v1118 = vsel %vm1102, 1.0, 0.0
        %v1119 = vsel %vm1103, 1.0, 0.0
        %v1120 = vsel %vm1104, 1.0, 0.0
        %v1121 = vsel %vm1105, 1.0, 0.0
        %v1122 = vsel %vm1106, 1.0, 0.0
        %v1123 = vsel %vm1107, 1.0, 0.0
        %v1124 = vsel %vm1108, 1.0, 0.0
        %v1125 = vsel %vm1109, 1.0, 0.0
        %v1126 = vsel %vm1110, 1.0, 0.0
        %v1127 = vsel %vm1111, 1.0, 0.0
        %v1128 = vsel %vm1112, 1.0, 0.0
        %v1129 = vsel %vm1113, 1.0, 0.0
        %v1130 = vsel %vm1114, 1.0, 0.0
        %v1131 = vsel %vm1115, 1.0, 0.0
        %v1132 = vsel %vm1116, 1.0, 0.0
        %v1133 = vpack.c.bf16 %v1118, %v1117
        %v1134 = vpack.c.bf16 %v1120, %v1119
        %v1135 = vpack.c.bf16 %v1122, %v1121
        %v1136 = vpack.c.bf16 %v1124, %v1123
        %v1137 = vpack.c.bf16 %v1126, %v1125
        %v1138 = vpack.c.bf16 %v1128, %v1127
        %v1139 = vpack.c.bf16 %v1130, %v1129
        %v1140 = vpack.c.bf16 %v1132, %v1131
        %s1141 = scalar_lea.vmem [#allocation3], 192
        %v1142 = vld [vmem:[%s1141] sm:$0xf]
        %v1143 = vld [vmem:[%s1141 + $0x4] sm:$0xf]
        %v1144 = vld [vmem:[%s1141 + $0x8] sm:$0xf]
        %v1145 = vld [vmem:[%s1141 + $0xc] sm:$0xf]
        %v1146 = vld [vmem:[%s1141 + $0x10] sm:$0xf]
        %v1147 = vld [vmem:[%s1141 + $0x14] sm:$0xf]
        %v1148 = vld [vmem:[%s1141 + $0x18] sm:$0xf]
        %v1149 = vld [vmem:[%s1141 + $0x1c] sm:$0xf]
        %v1150 = vld [vmem:[%s1141 + $0x20] sm:$0xf]
        %v1151 = vld [vmem:[%s1141 + $0x24] sm:$0xf]
        %v1152 = vld [vmem:[%s1141 + $0x28] sm:$0xf]
        %v1153 = vld [vmem:[%s1141 + $0x2c] sm:$0xf]
        %v1154 = vld [vmem:[%s1141 + $0x30] sm:$0xf]
        %v1155 = vld [vmem:[%s1141 + $0x34] sm:$0xf]
        %v1156 = vld [vmem:[%s1141 + $0x38] sm:$0xf]
        %v1157 = vld [vmem:[%s1141 + $0x3c] sm:$0xf]
        %v1174 = vunpack.c.l.b16 %v1142
        %v1175 = vunpack.c.l.b16 %v1143
        %v1176 = vunpack.c.l.b16 %v1144
        %v1177 = vunpack.c.l.b16 %v1145
        %v1178 = vunpack.c.l.b16 %v1146
        %v1179 = vunpack.c.l.b16 %v1147
        %v1180 = vunpack.c.l.b16 %v1148
        %v1181 = vunpack.c.l.b16 %v1149
        %v1182 = vunpack.c.l.b16 %v1150
        %v1183 = vunpack.c.l.b16 %v1151
        %v1184 = vunpack.c.l.b16 %v1152
        %v1185 = vunpack.c.l.b16 %v1153
        %v1186 = vunpack.c.l.b16 %v1154
        %v1187 = vunpack.c.l.b16 %v1155
        %v1188 = vunpack.c.l.b16 %v1156
        %v1189 = vunpack.c.l.b16 %v1157
        %v1190 = vpack.c.b16 %v1175, %v1174
        %v1191 = vpack.c.b16 %v1177, %v1176
        %v1192 = vpack.c.b16 %v1179, %v1178
        %v1193 = vpack.c.b16 %v1181, %v1180
        %v1194 = vpack.c.b16 %v1183, %v1182
        %v1195 = vpack.c.b16 %v1185, %v1184
        %v1196 = vpack.c.b16 %v1187, %v1186
        %v1197 = vpack.c.b16 %v1189, %v1188
        %1206 = vmatprep.subr.bf16.mxu0 0
        %1207 = vmatpush1.bf16.msra.mxu0 %v1190
        %1208 = vmatprep.subr.bf16.mxu0 0
        %1209 = vmatpush1.bf16.msra.mxu0 %v1191
        %1210 = vmatprep.subr.bf16.mxu0 0
        %1211 = vmatpush1.bf16.msra.mxu0 %v1192
        %1212 = vmatprep.subr.bf16.mxu0 0
        %1213 = vmatpush1.bf16.msra.mxu0 %v1193
        %1214 = vmatprep.subr.bf16.mxu0 0
        %1215 = vmatpush1.bf16.msra.mxu0 %v1194
        %1216 = vmatprep.subr.bf16.mxu0 0
        %1217 = vmatpush1.bf16.msra.mxu0 %v1195
        %1218 = vmatprep.subr.bf16.mxu0 0
        %1219 = vmatpush1.bf16.msra.mxu0 %v1196
        %1220 = vmatprep.subr.bf16.mxu0 0
        %1221 = vmatpush1.bf16.msra.mxu0 %v1197
        %1222 = vmatprep.subr.bf16.mxu0 0
        %1223 = vmatpush1.bf16.msra.mxu0 0
        %1224 = vmatprep.subr.bf16.mxu0 0
        %1225 = vmatpush1.bf16.msra.mxu0 0
        %1226 = vmatprep.subr.bf16.mxu0 0
        %1227 = vmatpush1.bf16.msra.mxu0 0
        %1228 = vmatprep.subr.bf16.mxu0 0
        %1229 = vmatpush1.bf16.msra.mxu0 0
        %1230 = vmatprep.subr.bf16.mxu0 0
        %1231 = vmatpush1.bf16.msra.mxu0 0
        %1232 = vmatprep.subr.bf16.mxu0 0
        %1233 = vmatpush1.bf16.msra.mxu0 0
        %1234 = vmatprep.subr.bf16.mxu0 0
        %1235 = vmatpush1.bf16.msra.mxu0 0
        %1236 = vmatprep.subr.bf16.mxu0 0
        %1237 = vmatpush1.bf16.msra.mxu0 0
        %1238 = vmatprep.mubr.bf16.mxu0 0
        %1239 = vmatmul.mubr.bf16.gmra.mrb[0].mxu0 %v1133
        %v1240 = vpop.f32.mrb[0].mxu0
        %v1241 = vadd.f32 0.0, %v1240
        %v1242 = vpop.f32.mrb[0].mxu0
        %v1243 = vpop.f32.mrb[0].mxu0
        %v1244 = vadd.f32 0.0, %v1243
        %v1245 = vpop.f32.mrb[0].mxu0
        %1246 = vmatprep.mubr.bf16.mxu0 0
        %1247 = vmatmul.mubr.bf16.gmra.mrb[0].mxu0 %v1134
        %v1248 = vpop.f32.mrb[0].mxu0
        %v1249 = vadd.f32 0.0, %v1248
        %v1250 = vpop.f32.mrb[0].mxu0
        %v1251 = vpop.f32.mrb[0].mxu0
        %v1252 = vadd.f32 0.0, %v1251
        %v1253 = vpop.f32.mrb[0].mxu0
        %1254 = vmatprep.mubr.bf16.mxu0 0
        %1255 = vmatmul.mubr.bf16.gmra.mrb[0].mxu0 %v1135
        %v1256 = vpop.f32.mrb[0].mxu0
        %v1257 = vadd.f32 0.0, %v1256
        %v1258 = vpop.f32.mrb[0].mxu0
        %v1259 = vpop.f32.mrb[0].mxu0
        %v1260 = vadd.f32 0.0, %v1259
        %v1261 = vpop.f32.mrb[0].mxu0
        %1262 = vmatprep.mubr.bf16.mxu0 0
        %1263 = vmatmul.mubr.bf16.gmra.mrb[0].mxu0 %v1136
        %v1264 = vpop.f32.mrb[0].mxu0
        %v1265 = vadd.f32 0.0, %v1264
        %v1266 = vpop.f32.mrb[0].mxu0
        %v1267 = vpop.f32.mrb[0].mxu0
        %v1268 = vadd.f32 0.0, %v1267
        %v1269 = vpop.f32.mrb[0].mxu0
        %1270 = vmatprep.mubr.bf16.mxu0 0
        %1271 = vmatmul.mubr.bf16.gmra.mrb[0].mxu0 %v1137
        %v1272 = vpop.f32.mrb[0].mxu0
        %v1273 = vadd.f32 0.0, %v1272
        %v1274 = vpop.f32.mrb[0].mxu0
        %v1275 = vpop.f32.mrb[0].mxu0
        %v1276 = vadd.f32 0.0, %v1275
        %v1277 = vpop.f32.mrb[0].mxu0
        %1278 = vmatprep.mubr.bf16.mxu0 0
        %1279 = vmatmul.mubr.bf16.gmra.mrb[0].mxu0 %v1138
        %v1280 = vpop.f32.mrb[0].mxu0
        %v1281 = vadd.f32 0.0, %v1280
        %v1282 = vpop.f32.mrb[0].mxu0
        %v1283 = vpop.f32.mrb[0].mxu0
        %v1284 = vadd.f32 0.0, %v1283
        %v1285 = vpop.f32.mrb[0].mxu0
        %1286 = vmatprep.mubr.bf16.mxu0 0
        %1287 = vmatmul.mubr.bf16.gmra.mrb[0].mxu0 %v1139
        %v1288 = vpop.f32.mrb[0].mxu0
        %v1289 = vadd.f32 0.0, %v1288
        %v1290 = vpop.f32.mrb[0].mxu0
        %v1291 = vpop.f32.mrb[0].mxu0
        %v1292 = vadd.f32 0.0, %v1291
        %v1293 = vpop.f32.mrb[0].mxu0
        %1294 = vmatprep.mubr.bf16.mxu0 0
        %1295 = vmatmul.mubr.bf16.gmra.mrb[0].mxu0 %v1140
        %v1296 = vpop.f32.mrb[0].mxu0
        %v1297 = vadd.f32 0.0, %v1296
        %v1298 = vpop.f32.mrb[0].mxu0
        %v1299 = vpop.f32.mrb[0].mxu0
        %v1300 = vadd.f32 0.0, %v1299
        %v1301 = vpop.f32.mrb[0].mxu0
        %1302 = vdwg.mxu0
        %v1303 = vadd.f32 %v1037, %v1241
        %v1304 = vadd.f32 %v1038, %v1244
        %v1305 = vadd.f32 %v1039, %v1249
        %v1306 = vadd.f32 %v1040, %v1252
        %v1307 = vadd.f32 %v1041, %v1257
        %v1308 = vadd.f32 %v1042, %v1260
        %v1309 = vadd.f32 %v1043, %v1265
        %v1310 = vadd.f32 %v1044, %v1268
        %v1311 = vadd.f32 %v1045, %v1273
        %v1312 = vadd.f32 %v1046, %v1276
        %v1313 = vadd.f32 %v1047, %v1281
        %v1314 = vadd.f32 %v1048, %v1284
        %v1315 = vadd.f32 %v1049, %v1289
        %v1316 = vadd.f32 %v1050, %v1292
        %v1317 = vadd.f32 %v1051, %v1297
        %v1318 = vadd.f32 %v1052, %v1300
        %1319 = vset.pattern.permute.xlu0 4
        %1320 = vperm.xlu0 %1319, %v270
        %v1321 = vpop.permute.xlu0 %1320
        %1322 = vset.pattern.permute.xlu0 4
        %1323 = vperm.xlu0 %1322, %v271
        %v1324 = vpop.permute.xlu0 %1323
        %1325 = vset.pattern.permute.xlu0 4
        %1326 = vperm.xlu0 %1325, %v272
        %v1327 = vpop.permute.xlu0 %1326
        %1328 = vset.pattern.permute.xlu0 4
        %1329 = vperm.xlu0 %1328, %v273
        %v1330 = vpop.permute.xlu0 %1329
        %1331 = vset.pattern.permute.xlu0 4
        %1332 = vperm.xlu0 %1331, %v274
        %v1333 = vpop.permute.xlu0 %1332
        %1334 = vset.pattern.permute.xlu0 4
        %1335 = vperm.xlu0 %1334, %v275
        %v1336 = vpop.permute.xlu0 %1335
        %1337 = vset.pattern.permute.xlu0 4
        %1338 = vperm.xlu0 %1337, %v276
        %v1339 = vpop.permute.xlu0 %1338
        %1340 = vset.pattern.permute.xlu0 4
        %1341 = vperm.xlu0 %1340, %v277
        %v1342 = vpop.permute.xlu0 %1341
        %1343 = vset.pattern.permute.xlu0 4
        %1344 = vperm.xlu0 %1343, %v278
        %v1345 = vpop.permute.xlu0 %1344
        %1346 = vset.pattern.permute.xlu0 4
        %1347 = vperm.xlu0 %1346, %v279
        %v1348 = vpop.permute.xlu0 %1347
        %1349 = vset.pattern.permute.xlu0 4
        %1350 = vperm.xlu0 %1349, %v280
        %v1351 = vpop.permute.xlu0 %1350
        %1352 = vset.pattern.permute.xlu0 4
        %1353 = vperm.xlu0 %1352, %v281
        %v1354 = vpop.permute.xlu0 %1353
        %1355 = vset.pattern.permute.xlu0 4
        %1356 = vperm.xlu0 %1355, %v282
        %v1357 = vpop.permute.xlu0 %1356
        %1358 = vset.pattern.permute.xlu0 4
        %1359 = vperm.xlu0 %1358, %v283
        %v1360 = vpop.permute.xlu0 %1359
        %1361 = vset.pattern.permute.xlu0 4
        %1362 = vperm.xlu0 %1361, %v284
        %v1363 = vpop.permute.xlu0 %1362
        %1364 = vset.pattern.permute.xlu0 4
        %1365 = vperm.xlu0 %1364, %v285
        %v1366 = vpop.permute.xlu0 %1365
        %vm1367 = vcmp.eq.s32.totalorder %v1321, %v287
        %vm1368 = vcmp.eq.s32.totalorder %v1324, %v287
        %vm1369 = vcmp.eq.s32.totalorder %v1327, %v287
        %vm1370 = vcmp.eq.s32.totalorder %v1330, %v287
        %vm1371 = vcmp.eq.s32.totalorder %v1333, %v287
        %vm1372 = vcmp.eq.s32.totalorder %v1336, %v287
        %vm1373 = vcmp.eq.s32.totalorder %v1339, %v287
        %vm1374 = vcmp.eq.s32.totalorder %v1342, %v287
        %vm1375 = vcmp.eq.s32.totalorder %v1345, %v287
        %vm1376 = vcmp.eq.s32.totalorder %v1348, %v287
        %vm1377 = vcmp.eq.s32.totalorder %v1351, %v287
        %vm1378 = vcmp.eq.s32.totalorder %v1354, %v287
        %vm1379 = vcmp.eq.s32.totalorder %v1357, %v287
        %vm1380 = vcmp.eq.s32.totalorder %v1360, %v287
        %vm1381 = vcmp.eq.s32.totalorder %v1363, %v287
        %vm1382 = vcmp.eq.s32.totalorder %v1366, %v287
        %v1383 = vsel %vm1367, 1.0, 0.0
        %v1384 = vsel %vm1368, 1.0, 0.0
        %v1385 = vsel %vm1369, 1.0, 0.0
        %v1386 = vsel %vm1370, 1.0, 0.0
        %v1387 = vsel %vm1371, 1.0, 0.0
        %v1388 = vsel %vm1372, 1.0, 0.0
        %v1389 = vsel %vm1373, 1.0, 0.0
        %v1390 = vsel %vm1374, 1.0, 0.0
        %v1391 = vsel %vm1375, 1.0, 0.0
        %v1392 = vsel %vm1376, 1.0, 0.0
        %v1393 = vsel %vm1377, 1.0, 0.0
        %v1394 = vsel %vm1378, 1.0, 0.0
        %v1395 = vsel %vm1379, 1.0, 0.0
        %v1396 = vsel %vm1380, 1.0, 0.0
        %v1397 = vsel %vm1381, 1.0, 0.0
        %v1398 = vsel %vm1382, 1.0, 0.0
        %v1399 = vpack.c.bf16 %v1384, %v1383
        %v1400 = vpack.c.bf16 %v1386, %v1385
        %v1401 = vpack.c.bf16 %v1388, %v1387
        %v1402 = vpack.c.bf16 %v1390, %v1389
        %v1403 = vpack.c.bf16 %v1392, %v1391
        %v1404 = vpack.c.bf16 %v1394, %v1393
        %v1405 = vpack.c.bf16 %v1396, %v1395
        %v1406 = vpack.c.bf16 %v1398, %v1397
        %s1407 = scalar_lea.vmem [#allocation3], 256
        %v1408 = vld [vmem:[%s1407] sm:$0xf]
        %v1409 = vld [vmem:[%s1407 + $0x4] sm:$0xf]
        %v1410 = vld [vmem:[%s1407 + $0x8] sm:$0xf]
        %v1411 = vld [vmem:[%s1407 + $0xc] sm:$0xf]
        %v1412 = vld [vmem:[%s1407 + $0x10] sm:$0xf]
        %v1413 = vld [vmem:[%s1407 + $0x14] sm:$0xf]
        %v1414 = vld [vmem:[%s1407 + $0x18] sm:$0xf]
        %v1415 = vld [vmem:[%s1407 + $0x1c] sm:$0xf]
        %v1416 = vld [vmem:[%s1407 + $0x20] sm:$0xf]
        %v1417 = vld [vmem:[%s1407 + $0x24] sm:$0xf]
        %v1418 = vld [vmem:[%s1407 + $0x28] sm:$0xf]
        %v1419 = vld [vmem:[%s1407 + $0x2c] sm:$0xf]
        %v1420 = vld [vmem:[%s1407 + $0x30] sm:$0xf]
        %v1421 = vld [vmem:[%s1407 + $0x34] sm:$0xf]
        %v1422 = vld [vmem:[%s1407 + $0x38] sm:$0xf]
        %v1423 = vld [vmem:[%s1407 + $0x3c] sm:$0xf]
        %v1440 = vunpack.c.l.b16 %v1408
        %v1441 = vunpack.c.l.b16 %v1409
        %v1442 = vunpack.c.l.b16 %v1410
        %v1443 = vunpack.c.l.b16 %v1411
        %v1444 = vunpack.c.l.b16 %v1412
        %v1445 = vunpack.c.l.b16 %v1413
        %v1446 = vunpack.c.l.b16 %v1414
        %v1447 = vunpack.c.l.b16 %v1415
        %v1448 = vunpack.c.l.b16 %v1416
        %v1449 = vunpack.c.l.b16 %v1417
        %v1450 = vunpack.c.l.b16 %v1418
        %v1451 = vunpack.c.l.b16 %v1419
        %v1452 = vunpack.c.l.b16 %v1420
        %v1453 = vunpack.c.l.b16 %v1421
        %v1454 = vunpack.c.l.b16 %v1422
        %v1455 = vunpack.c.l.b16 %v1423
        %v1456 = vpack.c.b16 %v1441, %v1440
        %v1457 = vpack.c.b16 %v1443, %v1442
        %v1458 = vpack.c.b16 %v1445, %v1444
        %v1459 = vpack.c.b16 %v1447, %v1446
        %v1460 = vpack.c.b16 %v1449, %v1448
        %v1461 = vpack.c.b16 %v1451, %v1450
        %v1462 = vpack.c.b16 %v1453, %v1452
        %v1463 = vpack.c.b16 %v1455, %v1454
        %1472 = vmatprep.subr.bf16.mxu0 0
        %1473 = vmatpush1.bf16.msra.mxu0 %v1456
        %1474 = vmatprep.subr.bf16.mxu0 0
        %1475 = vmatpush1.bf16.msra.mxu0 %v1457
        %1476 = vmatprep.subr.bf16.mxu0 0
        %1477 = vmatpush1.bf16.msra.mxu0 %v1458
        %1478 = vmatprep.subr.bf16.mxu0 0
        %1479 = vmatpush1.bf16.msra.mxu0 %v1459
        %1480 = vmatprep.subr.bf16.mxu0 0
        %1481 = vmatpush1.bf16.msra.mxu0 %v1460
        %1482 = vmatprep.subr.bf16.mxu0 0
        %1483 = vmatpush1.bf16.msra.mxu0 %v1461
        %1484 = vmatprep.subr.bf16.mxu0 0
        %1485 = vmatpush1.bf16.msra.mxu0 %v1462
        %1486 = vmatprep.subr.bf16.mxu0 0
        %1487 = vmatpush1.bf16.msra.mxu0 %v1463
        %1488 = vmatprep.subr.bf16.mxu0 0
        %1489 = vmatpush1.bf16.msra.mxu0 0
        %1490 = vmatprep.subr.bf16.mxu0 0
        %1491 = vmatpush1.bf16.msra.mxu0 0
        %1492 = vmatprep.subr.bf16.mxu0 0
        %1493 = vmatpush1.bf16.msra.mxu0 0
        %1494 = vmatprep.subr.bf16.mxu0 0
        %1495 = vmatpush1.bf16.msra.mxu0 0
        %1496 = vmatprep.subr.bf16.mxu0 0
        %1497 = vmatpush1.bf16.msra.mxu0 0
        %1498 = vmatprep.subr.bf16.mxu0 0
        %1499 = vmatpush1.bf16.msra.mxu0 0
        %1500 = vmatprep.subr.bf16.mxu0 0
        %1501 = vmatpush1.bf16.msra.mxu0 0
        %1502 = vmatprep.subr.bf16.mxu0 0
        %1503 = vmatpush1.bf16.msra.mxu0 0
        %1504 = vmatprep.mubr.bf16.mxu0 0
        %1505 = vmatmul.mubr.bf16.gmra.mrb[0].mxu0 %v1399
        %v1506 = vpop.f32.mrb[0].mxu0
        %v1507 = vadd.f32 0.0, %v1506
        %v1508 = vpop.f32.mrb[0].mxu0
        %v1509 = vpop.f32.mrb[0].mxu0
        %v1510 = vadd.f32 0.0, %v1509
        %v1511 = vpop.f32.mrb[0].mxu0
        %1512 = vmatprep.mubr.bf16.mxu0 0
        %1513 = vmatmul.mubr.bf16.gmra.mrb[0].mxu0 %v1400
        %v1514 = vpop.f32.mrb[0].mxu0
        %v1515 = vadd.f32 0.0, %v1514
        %v1516 = vpop.f32.mrb[0].mxu0
        %v1517 = vpop.f32.mrb[0].mxu0
        %v1518 = vadd.f32 0.0, %v1517
        %v1519 = vpop.f32.mrb[0].mxu0
        %1520 = vmatprep.mubr.bf16.mxu0 0
        %1521 = vmatmul.mubr.bf16.gmra.mrb[0].mxu0 %v1401
        %v1522 = vpop.f32.mrb[0].mxu0
        %v1523 = vadd.f32 0.0, %v1522
        %v1524 = vpop.f32.mrb[0].mxu0
        %v1525 = vpop.f32.mrb[0].mxu0
        %v1526 = vadd.f32 0.0, %v1525
        %v1527 = vpop.f32.mrb[0].mxu0
        %1528 = vmatprep.mubr.bf16.mxu0 0
        %1529 = vmatmul.mubr.bf16.gmra.mrb[0].mxu0 %v1402
        %v1530 = vpop.f32.mrb[0].mxu0
        %v1531 = vadd.f32 0.0, %v1530
        %v1532 = vpop.f32.mrb[0].mxu0
        %v1533 = vpop.f32.mrb[0].mxu0
        %v1534 = vadd.f32 0.0, %v1533
        %v1535 = vpop.f32.mrb[0].mxu0
        %1536 = vmatprep.mubr.bf16.mxu0 0
        %1537 = vmatmul.mubr.bf16.gmra.mrb[0].mxu0 %v1403
        %v1538 = vpop.f32.mrb[0].mxu0
        %v1539 = vadd.f32 0.0, %v1538
        %v1540 = vpop.f32.mrb[0].mxu0
        %v1541 = vpop.f32.mrb[0].mxu0
        %v1542 = vadd.f32 0.0, %v1541
        %v1543 = vpop.f32.mrb[0].mxu0
        %1544 = vmatprep.mubr.bf16.mxu0 0
        %1545 = vmatmul.mubr.bf16.gmra.mrb[0].mxu0 %v1404
        %v1546 = vpop.f32.mrb[0].mxu0
        %v1547 = vadd.f32 0.0, %v1546
        %v1548 = vpop.f32.mrb[0].mxu0
        %v1549 = vpop.f32.mrb[0].mxu0
        %v1550 = vadd.f32 0.0, %v1549
        %v1551 = vpop.f32.mrb[0].mxu0
        %1552 = vmatprep.mubr.bf16.mxu0 0
        %1553 = vmatmul.mubr.bf16.gmra.mrb[0].mxu0 %v1405
        %v1554 = vpop.f32.mrb[0].mxu0
        %v1555 = vadd.f32 0.0, %v1554
        %v1556 = vpop.f32.mrb[0].mxu0
        %v1557 = vpop.f32.mrb[0].mxu0
        %v1558 = vadd.f32 0.0, %v1557
        %v1559 = vpop.f32.mrb[0].mxu0
        %1560 = vmatprep.mubr.bf16.mxu0 0
        %1561 = vmatmul.mubr.bf16.gmra.mrb[0].mxu0 %v1406
        %v1562 = vpop.f32.mrb[0].mxu0
        %v1563 = vadd.f32 0.0, %v1562
        %v1564 = vpop.f32.mrb[0].mxu0
        %v1565 = vpop.f32.mrb[0].mxu0
        %v1566 = vadd.f32 0.0, %v1565
        %v1567 = vpop.f32.mrb[0].mxu0
        %1568 = vdwg.mxu0
        %v1569 = vadd.f32 %v1303, %v1507
        %v1570 = vadd.f32 %v1304, %v1510
        %v1571 = vadd.f32 %v1305, %v1515
        %v1572 = vadd.f32 %v1306, %v1518
        %v1573 = vadd.f32 %v1307, %v1523
        %v1574 = vadd.f32 %v1308, %v1526
        %v1575 = vadd.f32 %v1309, %v1531
        %v1576 = vadd.f32 %v1310, %v1534
        %v1577 = vadd.f32 %v1311, %v1539
        %v1578 = vadd.f32 %v1312, %v1542
        %v1579 = vadd.f32 %v1313, %v1547
        %v1580 = vadd.f32 %v1314, %v1550
        %v1581 = vadd.f32 %v1315, %v1555
        %v1582 = vadd.f32 %v1316, %v1558
        %v1583 = vadd.f32 %v1317, %v1563
        %v1584 = vadd.f32 %v1318, %v1566
        %v1585 = vld [vmem:[%s2] sm:$0x1]
        %v1587 = vlaneseq
        %v1588 = vshrl.u32 %v1587, 7
        %v1589 = vsub.s32 0, %v1588
        %v1590 = vrot.slane %v1585, %v1589
        %v1592 = vadd.f32 %v1569, %v1590
        %v1593 = vadd.f32 %v1570, %v1590
        %v1594 = vadd.f32 %v1571, %v1590
        %v1595 = vadd.f32 %v1572, %v1590
        %v1596 = vadd.f32 %v1573, %v1590
        %v1597 = vadd.f32 %v1574, %v1590
        %v1598 = vadd.f32 %v1575, %v1590
        %v1599 = vadd.f32 %v1576, %v1590
        %v1600 = vadd.f32 %v1577, %v1590
        %v1601 = vadd.f32 %v1578, %v1590
        %v1602 = vadd.f32 %v1579, %v1590
        %v1603 = vadd.f32 %v1580, %v1590
        %v1604 = vadd.f32 %v1581, %v1590
        %v1605 = vadd.f32 %v1582, %v1590
        %v1606 = vadd.f32 %v1583, %v1590
        %v1607 = vadd.f32 %v1584, %v1590
        %v1608 = vld [vmem:[%s3] sm:$0xff]
        %v1609 = vld [vmem:[%s3 + $0x8] sm:$0xff]
        %v1610 = vmul.f32 %v1592, %v1608
        %v1611 = vmul.f32 %v1593, %v1609
        %v1612 = vmul.f32 %v1594, %v1608
        %v1613 = vmul.f32 %v1595, %v1609
        %v1614 = vmul.f32 %v1596, %v1608
        %v1615 = vmul.f32 %v1597, %v1609
        %v1616 = vmul.f32 %v1598, %v1608
        %v1617 = vmul.f32 %v1599, %v1609
        %v1618 = vmul.f32 %v1600, %v1608
        %v1619 = vmul.f32 %v1601, %v1609
        %v1620 = vmul.f32 %v1602, %v1608
        %v1621 = vmul.f32 %v1603, %v1609
        %v1622 = vmul.f32 %v1604, %v1608
        %v1623 = vmul.f32 %v1605, %v1609
        %v1624 = vmul.f32 %v1606, %v1608
        %v1625 = vmul.f32 %v1607, %v1609
        %v1626 = vmax.f32 %v1610, 0.0
        %v1627 = vmax.f32 %v1611, 0.0
        %v1628 = vmax.f32 %v1612, 0.0
        %v1629 = vmax.f32 %v1613, 0.0
        %v1630 = vmax.f32 %v1614, 0.0
        %v1631 = vmax.f32 %v1615, 0.0
        %v1632 = vmax.f32 %v1616, 0.0
        %v1633 = vmax.f32 %v1617, 0.0
        %v1634 = vmax.f32 %v1618, 0.0
        %v1635 = vmax.f32 %v1619, 0.0
        %v1636 = vmax.f32 %v1620, 0.0
        %v1637 = vmax.f32 %v1621, 0.0
        %v1638 = vmax.f32 %v1622, 0.0
        %v1639 = vmax.f32 %v1623, 0.0
        %v1640 = vmax.f32 %v1624, 0.0
        %v1641 = vmax.f32 %v1625, 0.0
        %v1642 = vmax.f32 %v1626, %v1627
        %v1643 = vrot.slane %v1642, 4
        %v1644 = vmax.f32 %v1642, %v1643
        %v1645 = vrot.slane %v1644, 2
        %v1646 = vmax.f32 %v1644, %v1645
        %v1647 = vrot.slane %v1646, 1
        %v1648 = vmax.f32 %v1646, %v1647
        %v1649 = vmax.f32 %v1628, %v1629
        %v1650 = vrot.slane %v1649, 4
        %v1651 = vmax.f32 %v1649, %v1650
        %v1652 = vrot.slane %v1651, 2
        %v1653 = vmax.f32 %v1651, %v1652
        %v1654 = vrot.slane %v1653, 1
        %v1655 = vmax.f32 %v1653, %v1654
        %v1656 = vmax.f32 %v1630, %v1631
        %v1657 = vrot.slane %v1656, 4
        %v1658 = vmax.f32 %v1656, %v1657
        %v1659 = vrot.slane %v1658, 2
        %v1660 = vmax.f32 %v1658, %v1659
        %v1661 = vrot.slane %v1660, 1
        %v1662 = vmax.f32 %v1660, %v1661
        %v1663 = vmax.f32 %v1632, %v1633
        %v1664 = vrot.slane %v1663, 4
        %v1665 = vmax.f32 %v1663, %v1664
        %v1666 = vrot.slane %v1665, 2
        %v1667 = vmax.f32 %v1665, %v1666
        %v1668 = vrot.slane %v1667, 1
        %v1669 = vmax.f32 %v1667, %v1668
        %v1670 = vmax.f32 %v1634, %v1635
        %v1671 = vrot.slane %v1670, 4
        %v1672 = vmax.f32 %v1670, %v1671
        %v1673 = vrot.slane %v1672, 2
        %v1674 = vmax.f32 %v1672, %v1673
        %v1675 = vrot.slane %v1674, 1
        %v1676 = vmax.f32 %v1674, %v1675
        %v1677 = vmax.f32 %v1636, %v1637
        %v1678 = vrot.slane %v1677, 4
        %v1679 = vmax.f32 %v1677, %v1678
        %v1680 = vrot.slane %v1679, 2
        %v1681 = vmax.f32 %v1679, %v1680
        %v1682 = vrot.slane %v1681, 1
        %v1683 = vmax.f32 %v1681, %v1682
        %v1684 = vmax.f32 %v1638, %v1639
        %v1685 = vrot.slane %v1684, 4
        %v1686 = vmax.f32 %v1684, %v1685
        %v1687 = vrot.slane %v1686, 2
        %v1688 = vmax.f32 %v1686, %v1687
        %v1689 = vrot.slane %v1688, 1
        %v1690 = vmax.f32 %v1688, %v1689
        %v1691 = vmax.f32 %v1640, %v1641
        %v1692 = vrot.slane %v1691, 4
        %v1693 = vmax.f32 %v1691, %v1692
        %v1694 = vrot.slane %v1693, 2
        %v1695 = vmax.f32 %v1693, %v1694
        %v1696 = vrot.slane %v1695, 1
        %v1697 = vmax.f32 %v1695, %v1696
        %v1698 = vld [vmem:[%s4] sm:$0xff]
        %v1699 = vld [vmem:[#allocation2] sm:$0x1]
        %v1701 = vlaneseq
        %v1702 = vshrl.u32 %v1701, 7
        %v1703 = vsub.s32 0, %v1702
        %v1704 = vrot.slane %v1699, %v1703
        %1705 = vset.pattern.permute.xlu0 0
        %1706 = vperm.xlu0 %1705, %v1704
        %v1707 = vpop.permute.xlu0 %1706
        %vm1717 = vcmask 1041409
        %v1718 = vsel %vm1717, %v1655, %v1648
        %vm1719 = vcmask 1042434
        %v1720 = vsel %vm1719, %v1662, %v1718
        %vm1721 = vcmask 1043459
        %v1722 = vsel %vm1721, %v1669, %v1720
        %vm1723 = vcmask 1044484
        %v1724 = vsel %vm1723, %v1676, %v1722
        %vm1725 = vcmask 1045509
        %v1726 = vsel %vm1725, %v1683, %v1724
        %vm1727 = vcmask 1046534
        %v1728 = vsel %vm1727, %v1690, %v1726
        %vm1729 = vcmask 1047559
        %v1730 = vsel %vm1729, %v1697, %v1728
        %1732 = vmatprep.subr.mxu0 0.0
        %1733 = vmatpush1.xpose.msra.mxu0 %v1730
        %1734 = vmatprep.subr.mxu0 0.0
        %1735 = vmatpush1.xpose.msra.mxu0 0.0
        %1736 = vmatprep.subr.mxu0 0.0
        %1737 = vmatpush1.xpose.msra.mxu0 0.0
        %1738 = vmatprep.subr.mxu0 0.0
        %1739 = vmatpush1.xpose.msra.mxu0 0.0
        %1740 = vmatprep.subr.mxu0 0.0
        %1741 = vmatpush1.xpose.msra.mxu0 0.0
        %1742 = vmatprep.subr.mxu0 0.0
        %1743 = vmatpush1.xpose.msra.mxu0 0.0
        %1744 = vmatprep.subr.mxu0 0.0
        %1745 = vmatpush1.xpose.msra.mxu0 0.0
        %1746 = vmatprep.subr.mxu0 0.0
        %1747 = vmatpush1.xpose.msra.mxu0 0.0
        %1748 = vmatprep.subr.mxu0 0.0
        %1749 = vmatpush1.xpose.msra.mxu0 0.0
        %1750 = vmatprep.subr.mxu0 0.0
        %1751 = vmatpush1.xpose.msra.mxu0 0.0
        %1752 = vmatprep.subr.mxu0 0.0
        %1753 = vmatpush1.xpose.msra.mxu0 0.0
        %1754 = vmatprep.subr.mxu0 0.0
        %1755 = vmatpush1.xpose.msra.mxu0 0.0
        %1756 = vmatprep.subr.mxu0 0.0
        %1757 = vmatpush1.xpose.msra.mxu0 0.0
        %1758 = vmatprep.subr.mxu0 0.0
        %1759 = vmatpush1.xpose.msra.mxu0 0.0
        %1760 = vmatprep.subr.mxu0 0.0
        %1761 = vmatpush1.xpose.msra.mxu0 0.0
        %1762 = vmatprep.subr.mxu0 0.0
        %1763 = vmatpush1.xpose.msra.mxu0 0.0
        %1764 = vmatprep.subr.mxu0 0.0
        %1765 = vmatpush1.xpose.msra.mxu0 0.0
        %1766 = vmatprep.subr.mxu0 0.0
        %1767 = vmatpush1.xpose.msra.mxu0 0.0
        %1768 = vmatprep.subr.mxu0 0.0
        %1769 = vmatpush1.xpose.msra.mxu0 0.0
        %1770 = vmatprep.subr.mxu0 0.0
        %1771 = vmatpush1.xpose.msra.mxu0 0.0
        %1772 = vmatprep.subr.mxu0 0.0
        %1773 = vmatpush1.xpose.msra.mxu0 0.0
        %1774 = vmatprep.subr.mxu0 0.0
        %1775 = vmatpush1.xpose.msra.mxu0 0.0
        %1776 = vmatprep.subr.mxu0 0.0
        %1777 = vmatpush1.xpose.msra.mxu0 0.0
        %1778 = vmatprep.subr.mxu0 0.0
        %1779 = vmatpush1.xpose.msra.mxu0 0.0
        %1780 = vmatprep.subr.mxu0 0.0
        %1781 = vmatpush1.xpose.msra.mxu0 0.0
        %1782 = vmatprep.subr.mxu0 0.0
        %1783 = vmatpush1.xpose.msra.mxu0 0.0
        %1784 = vmatprep.subr.mxu0 0.0
        %1785 = vmatpush1.xpose.msra.mxu0 0.0
        %1786 = vmatprep.subr.mxu0 0.0
        %1787 = vmatpush1.xpose.msra.mxu0 0.0
        %1788 = vmatprep.subr.mxu0 0.0
        %1789 = vmatpush1.xpose.msra.mxu0 0.0
        %1790 = vmatprep.subr.mxu0 0.0
        %1791 = vmatpush1.xpose.msra.mxu0 0.0
        %1792 = vmatprep.subr.mxu0 0.0
        %1793 = vmatpush1.xpose.msra.mxu0 0.0
        %1794 = vmatprep.subr.mxu0 0.0
        %1795 = vmatpush1.xpose.msra.mxu0 0.0
        %1796 = vmatprep.mubr.f32.mxu0 0.0
        %1797 = vmatmul.mubr.f32.gmra.mrb[0].mxu0 %v1698
        %v1798 = vpop.f32.mrb[0].mxu0
        %v1799 = vadd.f32 %v1707, %v1798
        %v1800 = vpop.f32.mrb[0].mxu0
        %1801 = vdwg.mxu0
        %v1802 = vxor.u32 %v1799, 2147483648
        %v1803 = vmul.f32 %v1802, 1.442695
        %v1804 = vpow.pop %v1803
        %v1805 = vadd.f32 %v1804, 1.0
        %v1806 = vrcp.pop %v1805
        %v1807 = vmul.f32 1.0, %v1806
        %vm1808 = vcmask 64512
        %1809 = vst.msk [vmem:[%s262] sm:$0xff] %vm1808, %v1807
        %s1810 = sand.u32 %s162, 1
        %s1811 = scalar_lea.sflag [#allocation5], %s1810
        %s1812 = sand.u32 %s162, 1
        %s1813 = smul.addr %s1812, 8
        %s1814 = scalar_lea.vmem [#allocation6], %s1813
        // Predicated region
        $region49: #{tpu_custom_call.1} parent=43 // pred_check
          %p1815 = pneg %p172
        $region50: #{tpu_custom_call.1} parent=43 // pred_check_branch
          %1817 = sbr.rel (%p1815) target = $region52
        $region51: #{tpu_custom_call.1} parent=43 // pred_region
          %s1819 = ssub.s32 128, 128
          %1820 = vsyncadd %s1811, %s1819
          %s1821 = smul.addr %s23, 128
          %s1822 = scalar_lea.hbm %s6, %s1821
          %s1824 = sshll.u32 %s1814, 4
          %s1825 = int_to_ptr.vmem [resolvable:$true] %s1824
          %1827 = dma.vmem_to_hbm [thread:$0]  %s1825, 128, %s1822, %s1811
        $region52: #{tpu_custom_call.1} parent=43 // pred_fallthru
          _
      $region44: #{tpu_custom_call.1} parent=5 // pred_fallthru
        _
      %p1828 = scmp.le.s32.totalorder 2, %s18
      // Predicated region
      $region53: #{tpu_custom_call.1} parent=5 // pred_check
        %p1829 = pneg %p1828
      $region54: #{tpu_custom_call.1} parent=5 // pred_check_branch
        %1831 = sbr.rel (%p1829) target = $region56
      $region55: #{tpu_custom_call.1} parent=5 // pred_region
        %s1832 = ssub.s32 %s18, 2
        // Predicated region
        $region57: #{tpu_custom_call.1} parent=55 // pred_check
          %p1833 = pneg %p178
        $region58: #{tpu_custom_call.1} parent=55 // pred_check_branch
          %1835 = sbr.rel (%p1833) target = $region60
        $region59: #{tpu_custom_call.1} parent=55 // pred_region
          %s1836 = sand.u32 %s163, 1
          %s1837 = scalar_lea.sflag [#allocation5], %s1836
          %s1838 = sand.u32 %s163, 1
          %s1839 = smul.addr %s1838, 8
          %s1840 = scalar_lea.vmem [#allocation6], %s1839
          %1841 = dma.done %s1837, 128
        $region60: #{tpu_custom_call.1} parent=55 // pred_fallthru
          _
      $region56: #{tpu_custom_call.1} parent=5 // pred_fallthru
        _
    $region6: #{tpu_custom_call.1} parent=1 // loop_footer
      %s22 = sadd.s32 1, %s18
    $region7: #{tpu_custom_call.1} parent=1 // loop_footer_branch
      %17 = sbr.rel target = $region3
    $region8: #{tpu_custom_call.1} parent=1 // loop_exit
      _
    %1842 = vsyncpa [#allocation4], 1
    %s1843 = scalar_lea.sflag [#allocation4], 1
    %1844 = vsyncpa %s1843, 1
    %1845 = vsyncpa [#allocation5], 1
    %s1846 = scalar_lea.sflag [#allocation5], 1
    %1847 = vsyncpa %s1846, 1

</llo_original>
